<compile_context>
chip_gen: v5e
topology: v5e:2x2
jax: 0.10.0
libtpu: 0.0.40
codegen_flags: <defaults>
</compile_context>

<pallas_src>
import jax
import jax.numpy as jnp
from jax.experimental import pallas as pl
from jax.experimental.pallas import tpu as pltpu


def classification_kernel(x_ref, sv_ref,
                          wa1_ref, ba1_ref, wa2_ref, ba2_ref,
                          wc1_ref, bc1_ref, wc2_ref, bc2_ref,
                          y_ref, gw_ref):
    Bb, N, D = x_ref.shape
    E = wa1_ref.shape[1]

    x = x_ref[...].astype(jnp.float32)            # (Bb, N, D) bf16 -> f32 working copy
    sv = sv_ref[...]                              # (Bb, N)

    # ---- MIL2 attention, layer 1: fused (Bb*N, D) @ (D, E) on the MXU (bf16 in, f32 acc)
    x_flat = x.reshape(Bb * N, D)
    h = jnp.tanh(
        jnp.dot(x_flat.astype(jnp.bfloat16), wa1_ref[...],
                preferred_element_type=jnp.float32)
        + ba1_ref[...]
    )                                             # (Bb*N, E), f32
    h3 = h.reshape(Bb, N, E)                      # (Bb, N, E)

    # ---- attention layer 2 (E -> 1): contract E on the lane axis; scores land lane-major
    s = jnp.sum(h3 * wa2_ref[...].reshape(1, 1, E), axis=-1) + ba2_ref[0]   # (Bb, N)

    # ---- softmax over genes (lane axis), per bag
    s = s - jnp.max(s, axis=-1, keepdims=True)
    e = jnp.exp(s)
    a = e / jnp.sum(e, axis=-1, keepdims=True)    # (Bb, N)

    # gene_weights = softmax * sv_indicators (no re-normalization; matches PyTorch)
    w = a * sv                                    # (Bb, N), lane-dense store
    gw_ref[...] = w

    # ---- attention-weighted pooling on the MXU: (Bb,1,N) @ (Bb,N,D) -> (Bb,1,D)
    emb = jnp.einsum('bqn,bnd->bqd', w[:, None, :], x,
                     preferred_element_type=jnp.float32).reshape(Bb, D)

    # ---- classifier head: Linear(D->M) -> ReLU -> Linear(M->1), batched over Bb bags
    hc = jnp.maximum(
        jnp.dot(emb, wc1_ref[...].astype(jnp.float32),
                preferred_element_type=jnp.float32) + bc1_ref[...],
        0.0,
    )                                             # (Bb, M)
    y = jnp.dot(hc, wc2_ref[...], preferred_element_type=jnp.float32) + bc2_ref[0]
    y_ref[...] = y                                # (Bb, 1)


def _pick_batch_block(B, N):
    """Pick Bb so Bb*N >= ~128 fused rows, Bb a multiple of 8, >=2 grid steps when possible."""
    bb = max(8, ((pl.cdiv(128, N) + 7) // 8) * 8)
    b_pad = ((B + 7) // 8) * 8
    # keep at least two grid steps when the batch allows it (v7x megacore / pipelining)
    if b_pad >= 16 and (b_pad // 2) % 8 == 0:
        bb = min(bb, b_pad // 2)
    return min(bb, b_pad)


def classification_layer(gene_embedding, sv_indicators, params, *, batch_block=None):
    """Returns (y_pred, gene_weights) matching ClassificationLayer.forward (attention_dim > 0)."""
    B, N, D = gene_embedding.shape
    wa1, ba1, wa2, ba2, wc1, bc1, wc2, bc2 = params
    E = wa1.shape[1]
    M = wc1.shape[1]

    Bb = batch_block if batch_block is not None else _pick_batch_block(B, N)
    Bp = ((B + Bb - 1) // Bb) * Bb
    num_blocks = Bp // Bb

    # bf16 for the big embedding tensor (halves HBM traffic) and the two D-row weights.
    x = gene_embedding.astype(jnp.bfloat16)
    sv = sv_indicators.astype(jnp.float32)
    if Bp != B:
        x = jnp.pad(x, ((0, Bp - B), (0, 0), (0, 0)))
        sv = jnp.pad(sv, ((0, Bp - B), (0, 0)))

    wa1b = wa1.astype(jnp.bfloat16)
    wc1b = wc1.astype(jnp.bfloat16)
    wa2_row = wa2.reshape(1, E).astype(jnp.float32)   # (E,1) -> lane-major row (1,E)
    ba2_s = ba2.reshape(1).astype(jnp.float32)        # scalar bias -> SMEM
    bc2_s = bc2.reshape(1).astype(jnp.float32)        # scalar bias -> SMEM

    y_out, gw_out = pl.pallas_call(
        classification_kernel,
        out_shape=(
            jax.ShapeDtypeStruct((Bp, 1), jnp.float32),   # y_pred (one row per bag)
            jax.ShapeDtypeStruct((Bp, N), jnp.float32),   # gene weights, N on lanes
        ),
        grid=(num_blocks,),
        in_specs=[
            pl.BlockSpec((Bb, N, D), lambda b: (b, 0, 0)),    # gene_embedding (bf16 slab)
            pl.BlockSpec((Bb, N), lambda b: (b, 0)),          # sv_indicators (lane-dense)
            pl.BlockSpec((D, E), lambda b: (0, 0)),           # wa1 (bf16, resident)
            pl.BlockSpec((1, E), lambda b: (0, 0)),           # ba1
            pl.BlockSpec((1, E), lambda b: (0, 0)),           # wa2 (row layout)
            pl.BlockSpec(memory_space=pltpu.SMEM),            # ba2 scalar
            pl.BlockSpec((D, M), lambda b: (0, 0)),           # wc1 (bf16, resident)
            pl.BlockSpec((1, M), lambda b: (0, 0)),           # bc1
            pl.BlockSpec((M, 1), lambda b: (0, 0)),           # wc2
            pl.BlockSpec(memory_space=pltpu.SMEM),            # bc2 scalar
        ],
        out_specs=[
            pl.BlockSpec((Bb, 1), lambda b: (b, 0)),          # y_pred
            pl.BlockSpec((Bb, N), lambda b: (b, 0)),          # gene weights
        ],
        compiler_params=pltpu.CompilerParams(
            dimension_semantics=("parallel",),
        ),
    )(x, sv, wa1b, ba1, wa2_row, ba2_s, wc1b, bc1, wc2, bc2_s)

    y_pred = y_out[:B].reshape(B)             # torch .squeeze() on (B,1,1)
    gene_weights = gw_out[:B][:, None, :]     # (B, 1, N) == torch.unsqueeze(gw, 1)
    return y_pred, gene_weights


def reference(gene_embedding, sv_indicators, params):
    """Pure-JAX reference mirroring the PyTorch forward (attention_dim > 0).

    Inputs x / wa1 / wc1 are rounded through bf16 to mirror the kernel's input
    precision; all accumulation stays in f32 (precision='float32')."""
    wa1, ba1, wa2, ba2, wc1, bc1, wc2, bc2 = params
    xb = gene_embedding.astype(jnp.bfloat16).astype(jnp.float32)
    wa1b = wa1.astype(jnp.bfloat16).astype(jnp.float32)
    wc1b = wc1.astype(jnp.bfloat16).astype(jnp.float32)
    with jax.default_matmul_precision("float32"):
        h = jnp.tanh(xb @ wa1b + ba1)
        s = h @ wa2 + ba2                              # (B, N, 1)
        a = jax.nn.softmax(s, axis=-2)
        gw = jnp.squeeze(a, axis=-1) * sv_indicators   # (B, N)
        gw = gw[:, None, :]                            # (B, 1, N)
        emb = gw @ xb                                  # (B, 1, D)
        hc = jnp.maximum(emb @ wc1b + bc1, 0.0)
        y = hc @ wc2 + bc2                             # (B, 1, 1)
    return jnp.squeeze(y), gw


def init_params(key, input_dim, middle_dim, attention_dim):
    """Deterministic init mimicking nn.Linear's uniform(-1/sqrt(fan_in), 1/sqrt(fan_in))."""
    ks = jax.random.split(key, 8)

    def lin(kw, kb, fan_in, fan_out):
        bound = 1.0 / jnp.sqrt(fan_in)
        w = jax.random.uniform(kw, (fan_in, fan_out), jnp.float32, -bound, bound)
        b = jax.random.uniform(kb, (1, fan_out), jnp.float32, -bound, bound)
        return w, b

    wa1, ba1 = lin(ks[0], ks[1], input_dim, attention_dim)
    wa2, ba2 = lin(ks[2], ks[3], attention_dim, 1)
    wc1, bc1 = lin(ks[4], ks[5], input_dim, middle_dim)
    wc2, bc2 = lin(ks[6], ks[7], middle_dim, 1)
    return (wa1, ba1, wa2, ba2, wc1, bc1, wc2, bc2)


if __name__ == "__main__":
    B, N, D = 32, 8, 32          # bags, genes per bag, input_dim
    E, M = 16, 16                # attention_dim, middel_dim

    key = jax.random.PRNGKey(0)
    k_x, k_sv, k_p = jax.random.split(key, 3)

    gene_embedding = jax.random.normal(k_x, (B, N, D), jnp.float32)
    sv_indicators = jax.random.bernoulli(k_sv, 0.7, (B, N)).astype(jnp.float32)
    params = init_params(k_p, D, M, E)

    y_pred, gene_weights = classification_layer(gene_embedding, sv_indicators, params)
    y_pred = jax.block_until_ready(y_pred)
    gene_weights = jax.block_until_ready(gene_weights)

    y_ref, gw_ref = reference(gene_embedding, sv_indicators, params)
    assert y_pred.shape == (B,)
    assert gene_weights.shape == (B, 1, N)
    assert jnp.allclose(y_pred, y_ref, atol=1e-5, rtol=1e-4)
    assert jnp.allclose(gene_weights, gw_ref, atol=1e-5, rtol=1e-4)

    print("KERNEL_OK")
</pallas_src>

<mosaic_0001>
module attributes {stable_mosaic.version = 11 : i64} {
  func.func @classification_kernel(%arg0: i32, %arg1: memref<16x8x32xbf16, #tpu.memory_space<vmem>>, %arg2: memref<16x8xf32, #tpu.memory_space<vmem>>, %arg3: memref<32x16xbf16, #tpu.memory_space<vmem>>, %arg4: memref<1x16xf32, #tpu.memory_space<vmem>>, %arg5: memref<1x16xf32, #tpu.memory_space<vmem>>, %arg6: memref<1xf32, #tpu.memory_space<smem>>, %arg7: memref<32x16xbf16, #tpu.memory_space<vmem>>, %arg8: memref<1x16xf32, #tpu.memory_space<vmem>>, %arg9: memref<16x1xf32, #tpu.memory_space<vmem>>, %arg10: memref<1xf32, #tpu.memory_space<smem>>, %arg11: memref<16x1xf32, #tpu.memory_space<vmem>>, %arg12: memref<16x8xf32, #tpu.memory_space<vmem>>) attributes {dimension_semantics = [#tpu.dimension_semantics<parallel>], iteration_bounds = array<i64: 2>, scalar_prefetch = 0 : i64, scratch_operands = 0 : i64, tpu.core_type = #tpu.core_type<tc>, window_params = [{transform_indices = @transform_0, window_bounds = array<i64: 16, 8, 32>}, {transform_indices = @transform_1, window_bounds = array<i64: 16, 8>}, {pipeline_mode = #tpu.pipeline_mode<synchronous>, transform_indices = @transform_2, window_bounds = array<i64: 32, 16>}, {pipeline_mode = #tpu.pipeline_mode<synchronous>, transform_indices = @transform_3, window_bounds = array<i64: 1, 16>}, {pipeline_mode = #tpu.pipeline_mode<synchronous>, transform_indices = @transform_4, window_bounds = array<i64: 1, 16>}, {transform_indices = @transform_5, window_bounds = array<i64: 1>}, {pipeline_mode = #tpu.pipeline_mode<synchronous>, transform_indices = @transform_6, window_bounds = array<i64: 32, 16>}, {pipeline_mode = #tpu.pipeline_mode<synchronous>, transform_indices = @transform_7, window_bounds = array<i64: 1, 16>}, {pipeline_mode = #tpu.pipeline_mode<synchronous>, transform_indices = @transform_8, window_bounds = array<i64: 16, 1>}, {transform_indices = @transform_9, window_bounds = array<i64: 1>}, {transform_indices = @transform_10, window_bounds = array<i64: 16, 1>}, {transform_indices = @transform_11, window_bounds = array<i64: 16, 8>}]} {
    %c0 = arith.constant 0 : index
    %c0_0 = arith.constant 0 : index
    %c0_1 = arith.constant 0 : index
    %0 = vector.load %arg1[%c0, %c0_0, %c0_1] : memref<16x8x32xbf16, #tpu.memory_space<vmem>>, vector<16x8x32xbf16>
    %1 = arith.extf %0 : vector<16x8x32xbf16> to vector<16x8x32xf32>
    %c0_2 = arith.constant 0 : index
    %c0_3 = arith.constant 0 : index
    %2 = vector.load %arg2[%c0_2, %c0_3] : memref<16x8xf32, #tpu.memory_space<vmem>>, vector<16x8xf32>
    %3 = vector.shape_cast %1 : vector<16x8x32xf32> to vector<128x32xf32>
    %4 = arith.truncf %3 : vector<128x32xf32> to vector<128x32xbf16>
    %c0_4 = arith.constant 0 : index
    %c0_5 = arith.constant 0 : index
    %5 = vector.load %arg3[%c0_4, %c0_5] : memref<32x16xbf16, #tpu.memory_space<vmem>>, vector<32x16xbf16>
    %cst = arith.constant dense<0.000000e+00> : vector<128x16xf32>
    %6 = tpu.matmul %4, %5, %cst {dimension_numbers = #tpu.dot_dimension_numbers<[1], [0], [0], [1], [0, 0, 1, 1], [], []>} : vector<128x32xbf16>, vector<32x16xbf16>, vector<128x16xf32> -> vector<128x16xf32>
    %c0_6 = arith.constant 0 : index
    %c0_7 = arith.constant 0 : index
    %7 = vector.load %arg4[%c0_6, %c0_7] : memref<1x16xf32, #tpu.memory_space<vmem>>, vector<1x16xf32>
    %8 = vector.broadcast %7 : vector<1x16xf32> to vector<128x16xf32>
    %9 = arith.addf %6, %8 : vector<128x16xf32>
    %10 = math.tanh %9 : vector<128x16xf32>
    %11 = vector.shape_cast %10 : vector<128x16xf32> to vector<16x8x16xf32>
    %c0_8 = arith.constant 0 : index
    %c0_9 = arith.constant 0 : index
    %12 = vector.load %arg5[%c0_8, %c0_9] : memref<1x16xf32, #tpu.memory_space<vmem>>, vector<1x16xf32>
    %13 = vector.shape_cast %12 : vector<1x16xf32> to vector<1x1x16xf32>
    %14 = vector.broadcast %13 : vector<1x1x16xf32> to vector<16x8x16xf32>
    %15 = arith.mulf %11, %14 : vector<16x8x16xf32>
    %cst_10 = arith.constant dense<0.000000e+00> : vector<16x8xf32>
    %16 = vector.multi_reduction <add>, %15, %cst_10 [2] : vector<16x8x16xf32> to vector<16x8xf32>
    %c0_11 = arith.constant 0 : index
    %17 = memref.load %arg6[%c0_11] : memref<1xf32, #tpu.memory_space<smem>>
    %18 = vector.broadcast %17 : f32 to vector<16x8xf32>
    %19 = arith.addf %16, %18 : vector<16x8xf32>
    %cst_12 = arith.constant dense<0xFF800000> : vector<16xf32>
    %20 = vector.multi_reduction <maximumf>, %19, %cst_12 [1] : vector<16x8xf32> to vector<16xf32>
    %21 = vector.shape_cast %20 : vector<16xf32> to vector<16x1xf32>
    %22 = vector.broadcast %21 : vector<16x1xf32> to vector<16x8xf32>
    %23 = arith.subf %19, %22 : vector<16x8xf32>
    %24 = math.exp %23 : vector<16x8xf32>
    %cst_13 = arith.constant dense<0.000000e+00> : vector<16xf32>
    %25 = vector.multi_reduction <add>, %24, %cst_13 [1] : vector<16x8xf32> to vector<16xf32>
    %26 = vector.shape_cast %25 : vector<16xf32> to vector<16x1xf32>
    %27 = vector.broadcast %26 : vector<16x1xf32> to vector<16x8xf32>
    %28 = arith.divf %24, %27 : vector<16x8xf32>
    %29 = arith.mulf %28, %2 : vector<16x8xf32>
    %c0_14 = arith.constant 0 : index
    %c0_15 = arith.constant 0 : index
    %30 = vector.load %arg12[%c0_14, %c0_15] : memref<16x8xf32, #tpu.memory_space<vmem>>, vector<16x8xf32>
    tpu.vector_store %arg12[%c0_14, %c0_15], %29 {strides = array<i32>} : memref<16x8xf32, #tpu.memory_space<vmem>>, vector<16x8xf32>,
    %31 = vector.shape_cast %29 : vector<16x8xf32> to vector<16x1x8xf32>
    "tpu.trace_start"() <{level = 10 : i32, message = "bqn,bnd->bqd"}> : () -> ()
    %cst_16 = arith.constant dense<0.000000e+00> : vector<16x1x32xf32>
    %32 = tpu.matmul %31, %1, %cst_16 {dimension_numbers = #tpu.dot_dimension_numbers<[2], [1], [1], [2], [0, 0, 0, 1, 1, 2], [0], [0]>} : vector<16x1x8xf32>, vector<16x8x32xf32>, vector<16x1x32xf32> -> vector<16x1x32xf32>
    "tpu.trace_stop"() : () -> ()
    %33 = vector.shape_cast %32 : vector<16x1x32xf32> to vector<16x32xf32>
    %c0_17 = arith.constant 0 : index
    %c0_18 = arith.constant 0 : index
    %34 = vector.load %arg7[%c0_17, %c0_18] : memref<32x16xbf16, #tpu.memory_space<vmem>>, vector<32x16xbf16>
    %35 = arith.extf %34 : vector<32x16xbf16> to vector<32x16xf32>
    %cst_19 = arith.constant dense<0.000000e+00> : vector<16x16xf32>
    %36 = tpu.matmul %33, %35, %cst_19 {dimension_numbers = #tpu.dot_dimension_numbers<[1], [0], [0], [1], [0, 0, 1, 1], [], []>} : vector<16x32xf32>, vector<32x16xf32>, vector<16x16xf32> -> vector<16x16xf32>
    %c0_20 = arith.constant 0 : index
    %c0_21 = arith.constant 0 : index
    %37 = vector.load %arg8[%c0_20, %c0_21] : memref<1x16xf32, #tpu.memory_space<vmem>>, vector<1x16xf32>
    %38 = vector.broadcast %37 : vector<1x16xf32> to vector<16x16xf32>
    %39 = arith.addf %36, %38 : vector<16x16xf32>
    %cst_22 = arith.constant 0.000000e+00 : f32
    %40 = vector.broadcast %cst_22 : f32 to vector<16x16xf32>
    %41 = arith.maximumf %39, %40 : vector<16x16xf32>
    %c0_23 = arith.constant 0 : index
    %c0_24 = arith.constant 0 : index
    %42 = vector.load %arg9[%c0_23, %c0_24] : memref<16x1xf32, #tpu.memory_space<vmem>>, vector<16x1xf32>
    %cst_25 = arith.constant dense<0.000000e+00> : vector<16x1xf32>
    %43 = tpu.matmul %41, %42, %cst_25 {dimension_numbers = #tpu.dot_dimension_numbers<[1], [0], [0], [1], [0, 0, 1, 1], [], []>} : vector<16x16xf32>, vector<16x1xf32>, vector<16x1xf32> -> vector<16x1xf32>
    %c0_26 = arith.constant 0 : index
    %44 = memref.load %arg10[%c0_26] : memref<1xf32, #tpu.memory_space<smem>>
    %45 = vector.broadcast %44 : f32 to vector<16x1xf32>
    %46 = arith.addf %43, %45 : vector<16x1xf32>
    %c0_27 = arith.constant 0 : index
    %c0_28 = arith.constant 0 : index
    %47 = vector.load %arg11[%c0_27, %c0_28] : memref<16x1xf32, #tpu.memory_space<vmem>>, vector<16x1xf32>
    tpu.vector_store %arg11[%c0_27, %c0_28], %46 {strides = array<i32>} : memref<16x1xf32, #tpu.memory_space<vmem>>, vector<16x1xf32>,
    return
  }
  func.func @transform_0(%arg0: i32) -> (i32, i32, i32) {
    %c0_i32 = arith.constant 0 : i32
    %c0_i32_0 = arith.constant 0 : i32
    %c0_i32_1 = arith.constant 0 : i32
    return %arg0, %c0_i32, %c0_i32_0 : i32, i32, i32
  }
  func.func @transform_1(%arg0: i32) -> (i32, i32) {
    %c0_i32 = arith.constant 0 : i32
    %c0_i32_0 = arith.constant 0 : i32
    return %arg0, %c0_i32 : i32, i32
  }
  func.func @transform_2(%arg0: i32) -> (i32, i32) {
    %c0_i32 = arith.constant 0 : i32
    %c0_i32_0 = arith.constant 0 : i32
    %c0_i32_1 = arith.constant 0 : i32
    return %c0_i32, %c0_i32_0 : i32, i32
  }
  func.func @transform_3(%arg0: i32) -> (i32, i32) {
    %c0_i32 = arith.constant 0 : i32
    %c0_i32_0 = arith.constant 0 : i32
    %c0_i32_1 = arith.constant 0 : i32
    return %c0_i32, %c0_i32_0 : i32, i32
  }
  func.func @transform_4(%arg0: i32) -> (i32, i32) {
    %c0_i32 = arith.constant 0 : i32
    %c0_i32_0 = arith.constant 0 : i32
    %c0_i32_1 = arith.constant 0 : i32
    return %c0_i32, %c0_i32_0 : i32, i32
  }
  func.func @transform_5(%arg0: i32) -> i32 {
    %c0_i32 = arith.constant 0 : i32
    %c0_i32_0 = arith.constant 0 : i32
    return %c0_i32 : i32
  }
  func.func @transform_6(%arg0: i32) -> (i32, i32) {
    %c0_i32 = arith.constant 0 : i32
    %c0_i32_0 = arith.constant 0 : i32
    %c0_i32_1 = arith.constant 0 : i32
    return %c0_i32, %c0_i32_0 : i32, i32
  }
  func.func @transform_7(%arg0: i32) -> (i32, i32) {
    %c0_i32 = arith.constant 0 : i32
    %c0_i32_0 = arith.constant 0 : i32
    %c0_i32_1 = arith.constant 0 : i32
    return %c0_i32, %c0_i32_0 : i32, i32
  }
  func.func @transform_8(%arg0: i32) -> (i32, i32) {
    %c0_i32 = arith.constant 0 : i32
    %c0_i32_0 = arith.constant 0 : i32
    %c0_i32_1 = arith.constant 0 : i32
    return %c0_i32, %c0_i32_0 : i32, i32
  }
  func.func @transform_9(%arg0: i32) -> i32 {
    %c0_i32 = arith.constant 0 : i32
    %c0_i32_0 = arith.constant 0 : i32
    return %c0_i32 : i32
  }
  func.func @transform_10(%arg0: i32) -> (i32, i32) {
    %c0_i32 = arith.constant 0 : i32
    %c0_i32_0 = arith.constant 0 : i32
    return %arg0, %c0_i32 : i32, i32
  }
  func.func @transform_11(%arg0: i32) -> (i32, i32) {
    %c0_i32 = arith.constant 0 : i32
    %c0_i32_0 = arith.constant 0 : i32
    return %arg0, %c0_i32 : i32, i32
  }
}

</mosaic_0001>

<llo_original>
// kernel: tpu_custom_call.1
$region0: #{tpu_custom_call.1}
  #allocation0 [shape = 'u32[]', space=smem, size = 0x4, offset = 0x4, fixed_abs, tag = 'smem constant byte address 0x4 - core index']
  #allocation1 [shape = 'u32[72,128]{1,0:T(1,128)}', space=vmem, size = 0x9000, scoped, tag = 'internal scratch']
  #allocation2 [shape = 'f32[1]{0:T(128)S(6)}', space=smem, size = 0x200, scoped, tag = 'scoped memory for tpu_custom_call.1']
  #allocation3 [shape = 'f32[1]{0:T(128)S(6)}', space=smem, size = 0x200, scoped, tag = 'scoped memory for tpu_custom_call.1']
  %s0 = inlined_call_operand.hbm [shape: bf16[32,8,32], index: 0, kind: input, shape index: {}]
  %s1 = inlined_call_operand.vmem [shape: f32[32,8], index: 1, kind: input, shape index: {}]
  %s2 = inlined_call_operand.vmem [shape: bf16[32,16], index: 2, kind: input, shape index: {}]
  %s3 = inlined_call_operand.vmem [shape: f32[1,16], index: 3, kind: input, shape index: {}]
  %s4 = inlined_call_operand.vmem [shape: f32[1,16], index: 4, kind: input, shape index: {}]
  %s5 = inlined_call_operand.<no memory space> [shape: f32[1], index: 5, kind: input, shape index: {}]
  %s6 = inlined_call_operand.vmem [shape: bf16[32,16], index: 6, kind: input, shape index: {}]
  %s7 = inlined_call_operand.vmem [shape: f32[1,16], index: 7, kind: input, shape index: {}]
  %s8 = inlined_call_operand.vmem [shape: f32[16,1], index: 8, kind: input, shape index: {}]
  %s9 = inlined_call_operand.<no memory space> [shape: f32[1], index: 9, kind: input, shape index: {}]
  %s10 = inlined_call_operand.vmem [shape: f32[32,1], index: 10, kind: output, shape index: {0}]
  %s11 = inlined_call_operand.vmem [shape: f32[32,8], index: 11, kind: output, shape index: {1}]
  %12 = xla_tuple %s10, %s11
  %s13 = sld [smem:[#allocation0]]
  $region85: #{tpu_custom_call.1} parent=0
    _
  %s15 = ssub.s32 1, %s13
  %s16 = scalar_select 0, %s15, %s13
  %17 = sst [smem:[#allocation2]] %s5
  %18 = sst [smem:[#allocation3]] %s9
  $region1: #{tpu_custom_call.1} parent=0
    #allocation4 [shape = 'u8[65536]{0}', space=vmem, size = 0x10000, scoped, tag = 'input window, operand 0']
    #allocation5 [shape = 's32[2]{0}', space=sflag, size = 0x8, scoped, tag = 'scoped memory for tpu_custom_call.1']
    %19 = vsyncpa [#allocation5], 0
    %s20 = scalar_lea.sflag [#allocation5], 1
    %21 = vsyncpa %s20, 0
    loop: start=0, step=1, limit=4
    $region2: #{tpu_custom_call.1} parent=1 // loop_pre_header
      _
    $region3: #{tpu_custom_call.1} parent=1 // loop_header
      %s23 = sphi 0, %s27
      %p24 = scmp.ge.s32.totalorder %s23, 4
      %s33 = sphi 0, %s35
      %s36 = sphi 0, %s33
      %s37 = sphi 0, %s36
      %s53 = sphi 0, %s37
      %s59 = sphi 0, %s61
      %s62 = sphi 0, %s59
      %s63 = sphi 0, %s62
      %s79 = sphi 0, %s63
      %s83 = sphi 0, %s83
      %s85 = sphi 0, %s83
      %s86 = sphi 0, %s85
      %s100 = sphi 0, %s86
      %s104 = sphi 0, %s104
      %s106 = sphi 0, %s104
      %s107 = sphi 0, %s106
      %s121 = sphi 0, %s107
      %s125 = sphi 0, %s125
      %s127 = sphi 0, %s125
      %s128 = sphi 0, %s127
      %s142 = sphi 0, %s128
      %s146 = sphi 0, %s146
      %s148 = sphi 0, %s146
      %s149 = sphi 0, %s148
      %s163 = sphi 0, %s149
      %s167 = sphi 0, %s167
      %s169 = sphi 0, %s167
      %s170 = sphi 0, %s169
      %s184 = sphi 0, %s170
      %s188 = sphi 0, %s188
      %s190 = sphi 0, %s188
      %s191 = sphi 0, %s190
      %s205 = sphi 0, %s191
      %s209 = sphi 0, %s209
      %s211 = sphi 0, %s209
      %s212 = sphi 0, %s211
      %s226 = sphi 0, %s212
      %s230 = sphi 0, %s230
      %s232 = sphi 0, %s230
      %s233 = sphi 0, %s232
      %s247 = sphi 0, %s233
      %s253 = sphi 0, %s255
      %s256 = sphi 0, %s253
      %s257 = sphi 0, %s256
      %s273 = sphi 0, %s257
      %s279 = sphi 0, %s281
      %s282 = sphi 0, %s279
      %s283 = sphi 0, %s282
      %s299 = sphi 0, %s283
    $region4: #{tpu_custom_call.1} parent=1 // loop_header_branch
      %26 = sbr.rel (%p24) target = $region8
    $region5: #{tpu_custom_call.1} parent=1 // loop_body
      %s28 = ssub.s32 %s23, 1
      %s29 = ssub.s32 %s23, 2
      %s30 = sadd.s32 %s23, 1
      %s31 = ssub.s32 %s23, %s30
      %p32 = scmp.eq.s32.totalorder %s31, 0
      %s34 = sadd.s32 %s33, 1
      %s35 = scalar_select %p32, %s33, %s34
      %p38 = pneg %p32
      %p39 = scmp.eq.s32.totalorder %s23, 1
      %p40 = por %p38, %p39
      %p41 = scmp.ne.s32.totalorder %s33, %s36
      %p42 = scmp.eq.s32.totalorder %s23, 0
      %p43 = por %p41, %p42
      %p44 = scmp.ne.s32.totalorder %s33, %s36
      %p45 = scmp.eq.s32.totalorder %s28, 1
      %p46 = por %p44, %p45
      %p47 = scmp.ne.s32.totalorder %s36, %s37
      %p48 = scmp.eq.s32.totalorder %s28, 0
      %p49 = por %p47, %p48
      %p50 = scmp.ne.s32.totalorder %s36, %s37
      %p51 = scmp.eq.s32.totalorder %s29, 1
      %p52 = por %p50, %p51
      %p54 = scmp.ne.s32.totalorder %s37, %s53
      %p55 = scmp.eq.s32.totalorder %s29, 0
      %p56 = por %p54, %p55
      %s57 = ssub.s32 %s23, %s30
      %p58 = scmp.eq.s32.totalorder %s57, 0
      %s60 = sadd.s32 %s59, 1
      %s61 = scalar_select %p58, %s59, %s60
      %p64 = pneg %p58
      %p65 = scmp.eq.s32.totalorder %s23, 1
      %p66 = por %p64, %p65
      %p67 = scmp.ne.s32.totalorder %s59, %s62
      %p68 = scmp.eq.s32.totalorder %s23, 0
      %p69 = por %p67, %p68
      %p70 = scmp.ne.s32.totalorder %s59, %s62
      %p71 = scmp.eq.s32.totalorder %s28, 1
      %p72 = por %p70, %p71
      %p73 = scmp.ne.s32.totalorder %s62, %s63
      %p74 = scmp.eq.s32.totalorder %s28, 0
      %p75 = por %p73, %p74
      %p76 = scmp.ne.s32.totalorder %s62, %s63
      %p77 = scmp.eq.s32.totalorder %s29, 1
      %p78 = por %p76, %p77
      %p80 = scmp.ne.s32.totalorder %s63, %s79
      %p81 = scmp.eq.s32.totalorder %s29, 0
      %p82 = por %p80, %p81
      %s84 = sadd.s32 %s83, 1
      %p87 = scmp.eq.s32.totalorder %s23, 1
      %p88 = scmp.ne.s32.totalorder %s83, %s85
      %p89 = scmp.eq.s32.totalorder %s23, 0
      %p90 = por %p88, %p89
      %p91 = scmp.ne.s32.totalorder %s83, %s85
      %p92 = scmp.eq.s32.totalorder %s28, 1
      %p93 = por %p91, %p92
      %p94 = scmp.ne.s32.totalorder %s85, %s86
      %p95 = scmp.eq.s32.totalorder %s28, 0
      %p96 = por %p94, %p95
      %p97 = scmp.ne.s32.totalorder %s85, %s86
      %p98 = scmp.eq.s32.totalorder %s29, 1
      %p99 = por %p97, %p98
      %p101 = scmp.ne.s32.totalorder %s86, %s100
      %p102 = scmp.eq.s32.totalorder %s29, 0
      %p103 = por %p101, %p102
      %s105 = sadd.s32 %s104, 1
      %p108 = scmp.eq.s32.totalorder %s23, 1
      %p109 = scmp.ne.s32.totalorder %s104, %s106
      %p110 = scmp.eq.s32.totalorder %s23, 0
      %p111 = por %p109, %p110
      %p112 = scmp.ne.s32.totalorder %s104, %s106
      %p113 = scmp.eq.s32.totalorder %s28, 1
      %p114 = por %p112, %p113
      %p115 = scmp.ne.s32.totalorder %s106, %s107
      %p116 = scmp.eq.s32.totalorder %s28, 0
      %p117 = por %p115, %p116
      %p118 = scmp.ne.s32.totalorder %s106, %s107
      %p119 = scmp.eq.s32.totalorder %s29, 1
      %p120 = por %p118, %p119
      %p122 = scmp.ne.s32.totalorder %s107, %s121
      %p123 = scmp.eq.s32.totalorder %s29, 0
      %p124 = por %p122, %p123
      %s126 = sadd.s32 %s125, 1
      %p129 = scmp.eq.s32.totalorder %s23, 1
      %p130 = scmp.ne.s32.totalorder %s125, %s127
      %p131 = scmp.eq.s32.totalorder %s23, 0
      %p132 = por %p130, %p131
      %p133 = scmp.ne.s32.totalorder %s125, %s127
      %p134 = scmp.eq.s32.totalorder %s28, 1
      %p135 = por %p133, %p134
      %p136 = scmp.ne.s32.totalorder %s127, %s128
      %p137 = scmp.eq.s32.totalorder %s28, 0
      %p138 = por %p136, %p137
      %p139 = scmp.ne.s32.totalorder %s127, %s128
      %p140 = scmp.eq.s32.totalorder %s29, 1
      %p141 = por %p139, %p140
      %p143 = scmp.ne.s32.totalorder %s128, %s142
      %p144 = scmp.eq.s32.totalorder %s29, 0
      %p145 = por %p143, %p144
      %s147 = sadd.s32 %s146, 1
      %p150 = scmp.eq.s32.totalorder %s23, 1
      %p151 = scmp.ne.s32.totalorder %s146, %s148
      %p152 = scmp.eq.s32.totalorder %s23, 0
      %p153 = por %p151, %p152
      %p154 = scmp.ne.s32.totalorder %s146, %s148
      %p155 = scmp.eq.s32.totalorder %s28, 1
      %p156 = por %p154, %p155
      %p157 = scmp.ne.s32.totalorder %s148, %s149
      %p158 = scmp.eq.s32.totalorder %s28, 0
      %p159 = por %p157, %p158
      %p160 = scmp.ne.s32.totalorder %s148, %s149
      %p161 = scmp.eq.s32.totalorder %s29, 1
      %p162 = por %p160, %p161
      %p164 = scmp.ne.s32.totalorder %s149, %s163
      %p165 = scmp.eq.s32.totalorder %s29, 0
      %p166 = por %p164, %p165
      %s168 = sadd.s32 %s167, 1
      %p171 = scmp.eq.s32.totalorder %s23, 1
      %p172 = scmp.ne.s32.totalorder %s167, %s169
      %p173 = scmp.eq.s32.totalorder %s23, 0
      %p174 = por %p172, %p173
      %p175 = scmp.ne.s32.totalorder %s167, %s169
      %p176 = scmp.eq.s32.totalorder %s28, 1
      %p177 = por %p175, %p176
      %p178 = scmp.ne.s32.totalorder %s169, %s170
      %p179 = scmp.eq.s32.totalorder %s28, 0
      %p180 = por %p178, %p179
      %p181 = scmp.ne.s32.totalorder %s169, %s170
      %p182 = scmp.eq.s32.totalorder %s29, 1
      %p183 = por %p181, %p182
      %p185 = scmp.ne.s32.totalorder %s170, %s184
      %p186 = scmp.eq.s32.totalorder %s29, 0
      %p187 = por %p185, %p186
      %s189 = sadd.s32 %s188, 1
      %p192 = scmp.eq.s32.totalorder %s23, 1
      %p193 = scmp.ne.s32.totalorder %s188, %s190
      %p194 = scmp.eq.s32.totalorder %s23, 0
      %p195 = por %p193, %p194
      %p196 = scmp.ne.s32.totalorder %s188, %s190
      %p197 = scmp.eq.s32.totalorder %s28, 1
      %p198 = por %p196, %p197
      %p199 = scmp.ne.s32.totalorder %s190, %s191
      %p200 = scmp.eq.s32.totalorder %s28, 0
      %p201 = por %p199, %p200
      %p202 = scmp.ne.s32.totalorder %s190, %s191
      %p203 = scmp.eq.s32.totalorder %s29, 1
      %p204 = por %p202, %p203
      %p206 = scmp.ne.s32.totalorder %s191, %s205
      %p207 = scmp.eq.s32.totalorder %s29, 0
      %p208 = por %p206, %p207
      %s210 = sadd.s32 %s209, 1
      %p213 = scmp.eq.s32.totalorder %s23, 1
      %p214 = scmp.ne.s32.totalorder %s209, %s211
      %p215 = scmp.eq.s32.totalorder %s23, 0
      %p216 = por %p214, %p215
      %p217 = scmp.ne.s32.totalorder %s209, %s211
      %p218 = scmp.eq.s32.totalorder %s28, 1
      %p219 = por %p217, %p218
      %p220 = scmp.ne.s32.totalorder %s211, %s212
      %p221 = scmp.eq.s32.totalorder %s28, 0
      %p222 = por %p220, %p221
      %p223 = scmp.ne.s32.totalorder %s211, %s212
      %p224 = scmp.eq.s32.totalorder %s29, 1
      %p225 = por %p223, %p224
      %p227 = scmp.ne.s32.totalorder %s212, %s226
      %p228 = scmp.eq.s32.totalorder %s29, 0
      %p229 = por %p227, %p228
      %s231 = sadd.s32 %s230, 1
      %p234 = scmp.eq.s32.totalorder %s23, 1
      %p235 = scmp.ne.s32.totalorder %s230, %s232
      %p236 = scmp.eq.s32.totalorder %s23, 0
      %p237 = por %p235, %p236
      %p238 = scmp.ne.s32.totalorder %s230, %s232
      %p239 = scmp.eq.s32.totalorder %s28, 1
      %p240 = por %p238, %p239
      %p241 = scmp.ne.s32.totalorder %s232, %s233
      %p242 = scmp.eq.s32.totalorder %s28, 0
      %p243 = por %p241, %p242
      %p244 = scmp.ne.s32.totalorder %s232, %s233
      %p245 = scmp.eq.s32.totalorder %s29, 1
      %p246 = por %p244, %p245
      %p248 = scmp.ne.s32.totalorder %s233, %s247
      %p249 = scmp.eq.s32.totalorder %s29, 0
      %p250 = por %p248, %p249
      %s251 = ssub.s32 %s23, %s30
      %p252 = scmp.eq.s32.totalorder %s251, 0
      %s254 = sadd.s32 %s253, 1
      %s255 = scalar_select %p252, %s253, %s254
      %p258 = pneg %p252
      %p259 = scmp.eq.s32.totalorder %s23, 1
      %p260 = por %p258, %p259
      %p261 = scmp.ne.s32.totalorder %s253, %s256
      %p262 = scmp.eq.s32.totalorder %s23, 0
      %p263 = por %p261, %p262
      %p264 = scmp.ne.s32.totalorder %s253, %s256
      %p265 = scmp.eq.s32.totalorder %s28, 1
      %p266 = por %p264, %p265
      %p267 = scmp.ne.s32.totalorder %s256, %s257
      %p268 = scmp.eq.s32.totalorder %s28, 0
      %p269 = por %p267, %p268
      %p270 = scmp.ne.s32.totalorder %s256, %s257
      %p271 = scmp.eq.s32.totalorder %s29, 1
      %p272 = por %p270, %p271
      %p274 = scmp.ne.s32.totalorder %s257, %s273
      %p275 = scmp.eq.s32.totalorder %s29, 0
      %p276 = por %p274, %p275
      %s277 = ssub.s32 %s23, %s30
      %p278 = scmp.eq.s32.totalorder %s277, 0
      %s280 = sadd.s32 %s279, 1
      %s281 = scalar_select %p278, %s279, %s280
      %p284 = pneg %p278
      %p285 = scmp.eq.s32.totalorder %s23, 1
      %p286 = por %p284, %p285
      %p287 = scmp.ne.s32.totalorder %s279, %s282
      %p288 = scmp.eq.s32.totalorder %s23, 0
      %p289 = por %p287, %p288
      %p290 = scmp.ne.s32.totalorder %s279, %s282
      %p291 = scmp.eq.s32.totalorder %s28, 1
      %p292 = por %p290, %p291
      %p293 = scmp.ne.s32.totalorder %s282, %s283
      %p294 = scmp.eq.s32.totalorder %s28, 0
      %p295 = por %p293, %p294
      %p296 = scmp.ne.s32.totalorder %s282, %s283
      %p297 = scmp.eq.s32.totalorder %s29, 1
      %p298 = por %p296, %p297
      %p300 = scmp.ne.s32.totalorder %s283, %s299
      %p301 = scmp.eq.s32.totalorder %s29, 0
      %p302 = por %p300, %p301
      %p303 = scmp.le.s32.totalorder 1, %s23
      %p304 = scmp.lt.s32.totalorder %s23, 3
      %p305 = pnand %p303, %p304
      %p306 = pneg %p305
      // Predicated region
      $region9: #{tpu_custom_call.1} parent=5 // pred_check
        _
      $region10: #{tpu_custom_call.1} parent=5 // pred_check_branch
        %308 = sbr.rel (%p305) target = $region12
      $region11: #{tpu_custom_call.1} parent=5 // pred_region
        %s309 = ssub.s32 %s23, 1
        // Predicated region
        $region13: #{tpu_custom_call.1} parent=11 // pred_check
          %p310 = pneg %p96
        $region14: #{tpu_custom_call.1} parent=11 // pred_check_branch
          %312 = sbr.rel (%p310) target = $region16
        $region15: #{tpu_custom_call.1} parent=11 // pred_region
          _
        $region16: #{tpu_custom_call.1} parent=11 // pred_fallthru
          _
        // Predicated region
        $region17: #{tpu_custom_call.1} parent=11 // pred_check
          %p313 = pneg %p117
        $region18: #{tpu_custom_call.1} parent=11 // pred_check_branch
          %315 = sbr.rel (%p313) target = $region20
        $region19: #{tpu_custom_call.1} parent=11 // pred_region
          _
        $region20: #{tpu_custom_call.1} parent=11 // pred_fallthru
          _
        // Predicated region
        $region21: #{tpu_custom_call.1} parent=11 // pred_check
          %p316 = pneg %p138
        $region22: #{tpu_custom_call.1} parent=11 // pred_check_branch
          %318 = sbr.rel (%p316) target = $region24
        $region23: #{tpu_custom_call.1} parent=11 // pred_region
          _
        $region24: #{tpu_custom_call.1} parent=11 // pred_fallthru
          _
        // Predicated region
        $region25: #{tpu_custom_call.1} parent=11 // pred_check
          %p319 = pneg %p159
        $region26: #{tpu_custom_call.1} parent=11 // pred_check_branch
          %321 = sbr.rel (%p319) target = $region28
        $region27: #{tpu_custom_call.1} parent=11 // pred_region
          _
        $region28: #{tpu_custom_call.1} parent=11 // pred_fallthru
          _
        // Predicated region
        $region29: #{tpu_custom_call.1} parent=11 // pred_check
          %p322 = pneg %p180
        $region30: #{tpu_custom_call.1} parent=11 // pred_check_branch
          %324 = sbr.rel (%p322) target = $region32
        $region31: #{tpu_custom_call.1} parent=11 // pred_region
          _
        $region32: #{tpu_custom_call.1} parent=11 // pred_fallthru
          _
        // Predicated region
        $region33: #{tpu_custom_call.1} parent=11 // pred_check
          %p325 = pneg %p201
        $region34: #{tpu_custom_call.1} parent=11 // pred_check_branch
          %327 = sbr.rel (%p325) target = $region36
        $region35: #{tpu_custom_call.1} parent=11 // pred_region
          _
        $region36: #{tpu_custom_call.1} parent=11 // pred_fallthru
          _
        // Predicated region
        $region37: #{tpu_custom_call.1} parent=11 // pred_check
          %p328 = pneg %p222
        $region38: #{tpu_custom_call.1} parent=11 // pred_check_branch
          %330 = sbr.rel (%p328) target = $region40
        $region39: #{tpu_custom_call.1} parent=11 // pred_region
          _
        $region40: #{tpu_custom_call.1} parent=11 // pred_fallthru
          _
        // Predicated region
        $region41: #{tpu_custom_call.1} parent=11 // pred_check
          %p331 = pneg %p243
        $region42: #{tpu_custom_call.1} parent=11 // pred_check_branch
          %333 = sbr.rel (%p331) target = $region44
        $region43: #{tpu_custom_call.1} parent=11 // pred_region
          _
        $region44: #{tpu_custom_call.1} parent=11 // pred_fallthru
          _
      $region12: #{tpu_custom_call.1} parent=5 // pred_fallthru
        _
      %p334 = scmp.lt.s32.totalorder %s23, 2
      // Predicated region
      $region45: #{tpu_custom_call.1} parent=5 // pred_check
        %p335 = pneg %p334
      $region46: #{tpu_custom_call.1} parent=5 // pred_check_branch
        %337 = sbr.rel (%p335) target = $region48
      $region47: #{tpu_custom_call.1} parent=5 // pred_region
        // Predicated region
        $region49: #{tpu_custom_call.1} parent=47 // pred_check
          %p338 = pneg %p43
        $region50: #{tpu_custom_call.1} parent=47 // pred_check_branch
          %340 = sbr.rel (%p338) target = $region52
        $region51: #{tpu_custom_call.1} parent=47 // pred_region
          %s341 = sand.u32 %s33, 1
          %s342 = scalar_lea.sflag [#allocation5], %s341
          %s343 = sand.u32 %s33, 1
          %s344 = smul.addr %s343, 64
          %s345 = scalar_lea.vmem [#allocation4], %s344
          %s346 = smul.u32 16, %s23
          %348 = vsyncadd %s342, 0
          %s349 = smul.addr %s346, 4
          %s350 = scalar_lea.hbm %s0, %s349
          %s351 = sshll.u32 %s350, 4
          %s352 = int_to_ptr.hbm [resolvable:$true] %s351
          %s353 = sshll.u32 %s345, 4
          %s354 = int_to_ptr.vmem [resolvable:$true] %s353
          %359 = dma.hbm_to_vmem [thread:$0]  %s352, 1024, %s354, %s342, 64, 64, 4
        $region52: #{tpu_custom_call.1} parent=47 // pred_fallthru
          _
        // Predicated region
        $region53: #{tpu_custom_call.1} parent=47 // pred_check
          %p360 = pneg %p69
        $region54: #{tpu_custom_call.1} parent=47 // pred_check_branch
          %362 = sbr.rel (%p360) target = $region56
        $region55: #{tpu_custom_call.1} parent=47 // pred_region
          %s363 = smul.u32 2, %s23
          %p364 = scmp.lt.s32.totalorder %s363, 3
          %s365 = scalar_select %p364, %s363, 3
          %s366 = smul.addr %s365, 8
          %s367 = scalar_lea.vmem %s1, %s366
          %s368 = smul.u32 2, %s23
        $region56: #{tpu_custom_call.1} parent=47 // pred_fallthru
          _
      $region48: #{tpu_custom_call.1} parent=5 // pred_fallthru
        _
      %p369 = scmp.le.s32.totalorder 1, %s23
      %p370 = scmp.lt.s32.totalorder %s23, 3
      %p371 = pnand %p369, %p370
      %p372 = pneg %p371
      // Predicated region
      $region57: #{tpu_custom_call.1} parent=5 // pred_check
        _
      $region58: #{tpu_custom_call.1} parent=5 // pred_check_branch
        %374 = sbr.rel (%p371) target = $region60
      $region59: #{tpu_custom_call.1} parent=5 // pred_region
        %s375 = ssub.s32 %s23, 1
        %s376 = sand.u32 %s36, 1
        %s377 = scalar_lea.sflag [#allocation5], %s376
        %s378 = sand.u32 %s36, 1
        %s379 = smul.addr %s378, 64
        %s380 = scalar_lea.vmem [#allocation4], %s379
        // Predicated region
        $region61: #{tpu_custom_call.1} parent=59 // pred_check
          %p381 = pneg %p49
        $region62: #{tpu_custom_call.1} parent=59 // pred_check_branch
          %383 = sbr.rel (%p381) target = $region64
        $region63: #{tpu_custom_call.1} parent=59 // pred_region
          %385 = dma.done %s377, 1024
        $region64: #{tpu_custom_call.1} parent=59 // pred_fallthru
          _
        %s386 = sand.u32 %s36, 1
        %s387 = scalar_lea.sflag [#allocation5], %s386
        %s388 = sand.u32 %s36, 1
        %s389 = smul.addr %s388, 64
        %s390 = scalar_lea.vmem [#allocation4], %s389
        %p391 = pneg %p49
        %p392 = pneg %p46
        %s393 = smul.u32 2, %s28
        %p394 = scmp.lt.s32.totalorder %s393, 3
        %s395 = scalar_select %p394, %s393, 3
        %s396 = smul.addr %s395, 8
        %s397 = scalar_lea.vmem %s1, %s396
        %p398 = pneg %p75
        %p399 = pneg %p72
        %p400 = pneg %p96
        %p401 = pneg %p93
        %p402 = pneg %p117
        %p403 = pneg %p114
        %p404 = pneg %p138
        %p405 = pneg %p135
        %p406 = pneg %p159
        %p407 = pneg %p156
        %p408 = pneg %p180
        %p409 = pneg %p177
        %p410 = pneg %p201
        %p411 = pneg %p198
        %p412 = pneg %p222
        %p413 = pneg %p219
        %p414 = pneg %p243
        %p415 = pneg %p240
        %p416 = pneg %p269
        %p417 = pneg %p266
        %s418 = smul.u32 2, %s28
        %p419 = scmp.lt.s32.totalorder %s418, 3
        %s420 = scalar_select %p419, %s418, 3
        %s421 = smul.addr %s420, 8
        %s422 = scalar_lea.vmem %s10, %s421
        %p423 = pneg %p295
        %p424 = pneg %p292
        %s425 = smul.u32 2, %s28
        %p426 = scmp.lt.s32.totalorder %s425, 3
        %s427 = scalar_select %p426, %s425, 3
        %s428 = smul.addr %s427, 8
        %s429 = scalar_lea.vmem %s11, %s428
        %s430 = smul.u32 16, %s28
        %s431 = smul.u32 2, %s28
        %p432 = scmp.lt.s32.totalorder %s431, 3
        %s433 = scalar_select %p432, %s431, 3
        %s434 = smul.addr %s433, 8
        %s435 = scalar_lea.vmem %s1, %s434
        %s436 = smul.u32 2, %s28
        %s437 = smul.u32 2, %s28
        %p438 = scmp.lt.s32.totalorder %s437, 3
        %s439 = scalar_select %p438, %s437, 3
        %s440 = smul.addr %s439, 8
        %s441 = scalar_lea.vmem %s10, %s440
        %s442 = smul.u32 2, %s28
        %s443 = smul.u32 2, %s28
        %p444 = scmp.lt.s32.totalorder %s443, 3
        %s445 = scalar_select %p444, %s443, 3
        %s446 = smul.addr %s445, 8
        %s447 = scalar_lea.vmem %s11, %s446
        %s448 = smul.u32 2, %s28
        %v450 = vld [vmem:[%s380] sm:$0xf]
        %v451 = vld [vmem:[%s380 + $0x4] sm:$0xf]
        %v452 = vld [vmem:[%s380 + $0x8] sm:$0xf]
        %v453 = vld [vmem:[%s380 + $0xc] sm:$0xf]
        %v454 = vld [vmem:[%s380 + $0x10] sm:$0xf]
        %v455 = vld [vmem:[%s380 + $0x14] sm:$0xf]
        %v456 = vld [vmem:[%s380 + $0x18] sm:$0xf]
        %v457 = vld [vmem:[%s380 + $0x1c] sm:$0xf]
        %v458 = vld [vmem:[%s380 + $0x20] sm:$0xf]
        %v459 = vld [vmem:[%s380 + $0x24] sm:$0xf]
        %v460 = vld [vmem:[%s380 + $0x28] sm:$0xf]
        %v461 = vld [vmem:[%s380 + $0x2c] sm:$0xf]
        %v462 = vld [vmem:[%s380 + $0x30] sm:$0xf]
        %v463 = vld [vmem:[%s380 + $0x34] sm:$0xf]
        %v464 = vld [vmem:[%s380 + $0x38] sm:$0xf]
        %v465 = vld [vmem:[%s380 + $0x3c] sm:$0xf]
        %v466 = vunpack.c.l.bf16 %v450
        %v467 = vunpack.c.l.bf16 %v451
        %v468 = vunpack.c.l.bf16 %v452
        %v469 = vunpack.c.l.bf16 %v453
        %v470 = vunpack.c.l.bf16 %v454
        %v471 = vunpack.c.l.bf16 %v455
        %v472 = vunpack.c.l.bf16 %v456
        %v473 = vunpack.c.l.bf16 %v457
        %v474 = vunpack.c.l.bf16 %v458
        %v475 = vunpack.c.l.bf16 %v459
        %v476 = vunpack.c.l.bf16 %v460
        %v477 = vunpack.c.l.bf16 %v461
        %v478 = vunpack.c.l.bf16 %v462
        %v479 = vunpack.c.l.bf16 %v463
        %v480 = vunpack.c.l.bf16 %v464
        %v481 = vunpack.c.l.bf16 %v465
        %v482 = vld [vmem:[%s435] sm:$0xff]
        %v483 = vld [vmem:[%s435 + $0x8] sm:$0xff]
        %v484 = vpack.c.bf16 %v467, %v466
        %v485 = vpack.c.bf16 %v469, %v468
        %v486 = vpack.c.bf16 %v471, %v470
        %v487 = vpack.c.bf16 %v473, %v472
        %v488 = vpack.c.bf16 %v475, %v474
        %v489 = vpack.c.bf16 %v477, %v476
        %v490 = vpack.c.bf16 %v479, %v478
        %v491 = vpack.c.bf16 %v481, %v480
        %v492 = vld [vmem:[%s2] sm:$0xf]
        %v493 = vld [vmem:[%s2 + $0x4] sm:$0xf]
        %v494 = vld [vmem:[%s2 + $0x8] sm:$0xf]
        %v495 = vld [vmem:[%s2 + $0xc] sm:$0xf]
        %v496 = vld [vmem:[%s3] sm:$0x1]
        %v498 = vperm.slane %v496, 0
        %v504 = vunpack.c.l.b16 %v492
        %v505 = vunpack.c.l.b16 %v493
        %v506 = vunpack.c.l.b16 %v494
        %v507 = vunpack.c.l.b16 %v495
        %v508 = vpack.c.b16 %v505, %v504
        %v509 = vpack.c.b16 %v507, %v506
        %vm512 = vcmask 261120
        %v514 = vsel %vm512, %v484, 0
        %v517 = vsel %vm512, %v485, 0
        %v520 = vsel %vm512, %v486, 0
        %v523 = vsel %vm512, %v487, 0
        %v526 = vsel %vm512, %v488, 0
        %v529 = vsel %vm512, %v489, 0
        %v532 = vsel %vm512, %v490, 0
        %v535 = vsel %vm512, %v491, 0
        %537 = vmatpush.bf16.msra.mxu0 0
        %538 = vmatpush.bf16.msra.mxu0 0
        %539 = vmatpush.bf16.msra.mxu0 0
        %540 = vmatpush.bf16.msra.mxu0 0
        %541 = vmatpush.bf16.msra.mxu0 0
        %542 = vmatpush.bf16.msra.mxu0 0
        %543 = vmatpush.bf16.msra.mxu0 %v509
        %544 = vmatpush.bf16.msra.mxu0 %v508
        %545 = vmatmul.bf16.gmra.mxu0 %v514
        %v546 = vpop.f32.mrf.mxu0
        %v547 = vadd.f32 %v498, %v546
        %v548 = vpop.f32.mrf.mxu0
        %v549 = vadd.f32 %v498, %v548
        %550 = vmatmul.bf16.gmra.mxu0 %v517
        %v551 = vpop.f32.mrf.mxu0
        %v552 = vadd.f32 %v498, %v551
        %v553 = vpop.f32.mrf.mxu0
        %v554 = vadd.f32 %v498, %v553
        %555 = vmatmul.bf16.gmra.mxu0 %v520
        %v556 = vpop.f32.mrf.mxu0
        %v557 = vadd.f32 %v498, %v556
        %v558 = vpop.f32.mrf.mxu0
        %v559 = vadd.f32 %v498, %v558
        %560 = vmatmul.bf16.gmra.mxu0 %v523
        %v561 = vpop.f32.mrf.mxu0
        %v562 = vadd.f32 %v498, %v561
        %v563 = vpop.f32.mrf.mxu0
        %v564 = vadd.f32 %v498, %v563
        %565 = vmatmul.bf16.gmra.mxu0 %v526
        %v566 = vpop.f32.mrf.mxu0
        %v567 = vadd.f32 %v498, %v566
        %v568 = vpop.f32.mrf.mxu0
        %v569 = vadd.f32 %v498, %v568
        %570 = vmatmul.bf16.gmra.mxu0 %v529
        %v571 = vpop.f32.mrf.mxu0
        %v572 = vadd.f32 %v498, %v571
        %v573 = vpop.f32.mrf.mxu0
        %v574 = vadd.f32 %v498, %v573
        %575 = vmatmul.bf16.gmra.mxu0 %v532
        %v576 = vpop.f32.mrf.mxu0
        %v577 = vadd.f32 %v498, %v576
        %v578 = vpop.f32.mrf.mxu0
        %v579 = vadd.f32 %v498, %v578
        %580 = vmatmul.bf16.gmra.mxu0 %v535
        %v581 = vpop.f32.mrf.mxu0
        %v582 = vadd.f32 %v498, %v581
        %v583 = vpop.f32.mrf.mxu0
        %v584 = vadd.f32 %v498, %v583
        %585 = vdwg.mxu0
        %v586 = vtanh.pop %v547
        %v587 = vtanh.pop %v549
        %v588 = vtanh.pop %v552
        %v589 = vtanh.pop %v554
        %v590 = vtanh.pop %v557
        %v591 = vtanh.pop %v559
        %v592 = vtanh.pop %v562
        %v593 = vtanh.pop %v564
        %v594 = vtanh.pop %v567
        %v595 = vtanh.pop %v569
        %v596 = vtanh.pop %v572
        %v597 = vtanh.pop %v574
        %v598 = vtanh.pop %v577
        %v599 = vtanh.pop %v579
        %v600 = vtanh.pop %v582
        %v601 = vtanh.pop %v584
        %v602 = vld [vmem:[%s4] sm:$0x1]
        %v604 = vperm.slane %v602, 0
        %v606 = vmul.f32 %v586, %v604
        %v607 = vmul.f32 %v587, %v604
        %v608 = vmul.f32 %v588, %v604
        %v609 = vmul.f32 %v589, %v604
        %v610 = vmul.f32 %v590, %v604
        %v611 = vmul.f32 %v591, %v604
        %v612 = vmul.f32 %v592, %v604
        %v613 = vmul.f32 %v593, %v604
        %v614 = vmul.f32 %v594, %v604
        %v615 = vmul.f32 %v595, %v604
        %v616 = vmul.f32 %v596, %v604
        %v617 = vmul.f32 %v597, %v604
        %v618 = vmul.f32 %v598, %v604
        %v619 = vmul.f32 %v599, %v604
        %v620 = vmul.f32 %v600, %v604
        %v621 = vmul.f32 %v601, %v604
        %vm622 = vcmask 130048
        %v623 = vsel %vm622, %v606, 0.0
        %624 = vadd.xlane.f32.xlu0 %v623
        %v625 = vpop.xlane.xlu0 %624
        %v626 = vsel %vm622, %v607, 0.0
        %627 = vadd.xlane.f32.xlu0 %v626
        %v628 = vpop.xlane.xlu0 %627
        %v629 = vsel %vm622, %v608, 0.0
        %630 = vadd.xlane.f32.xlu0 %v629
        %v631 = vpop.xlane.xlu0 %630
        %v632 = vsel %vm622, %v609, 0.0
        %633 = vadd.xlane.f32.xlu0 %v632
        %v634 = vpop.xlane.xlu0 %633
        %v635 = vsel %vm622, %v610, 0.0
        %636 = vadd.xlane.f32.xlu0 %v635
        %v637 = vpop.xlane.xlu0 %636
        %v638 = vsel %vm622, %v611, 0.0
        %639 = vadd.xlane.f32.xlu0 %v638
        %v640 = vpop.xlane.xlu0 %639
        %v641 = vsel %vm622, %v612, 0.0
        %642 = vadd.xlane.f32.xlu0 %v641
        %v643 = vpop.xlane.xlu0 %642
        %v644 = vsel %vm622, %v613, 0.0
        %645 = vadd.xlane.f32.xlu0 %v644
        %v646 = vpop.xlane.xlu0 %645
        %v647 = vsel %vm622, %v614, 0.0
        %648 = vadd.xlane.f32.xlu0 %v647
        %v649 = vpop.xlane.xlu0 %648
        %v650 = vsel %vm622, %v615, 0.0
        %651 = vadd.xlane.f32.xlu0 %v650
        %v652 = vpop.xlane.xlu0 %651
        %v653 = vsel %vm622, %v616, 0.0
        %654 = vadd.xlane.f32.xlu0 %v653
        %v655 = vpop.xlane.xlu0 %654
        %v656 = vsel %vm622, %v617, 0.0
        %657 = vadd.xlane.f32.xlu0 %v656
        %v658 = vpop.xlane.xlu0 %657
        %v659 = vsel %vm622, %v618, 0.0
        %660 = vadd.xlane.f32.xlu0 %v659
        %v661 = vpop.xlane.xlu0 %660
        %v662 = vsel %vm622, %v619, 0.0
        %663 = vadd.xlane.f32.xlu0 %v662
        %v664 = vpop.xlane.xlu0 %663
        %v665 = vsel %vm622, %v620, 0.0
        %666 = vadd.xlane.f32.xlu0 %v665
        %v667 = vpop.xlane.xlu0 %666
        %v668 = vsel %vm622, %v621, 0.0
        %669 = vadd.xlane.f32.xlu0 %v668
        %v670 = vpop.xlane.xlu0 %669
        %s671 = sld [smem:[#allocation2]]
        %v672 = vstv %s671
        %v673 = vadd.f32 %v625, %v672
        %v674 = vadd.f32 %v628, %v672
        %v675 = vadd.f32 %v631, %v672
        %v676 = vadd.f32 %v634, %v672
        %v677 = vadd.f32 %v637, %v672
        %v678 = vadd.f32 %v640, %v672
        %v679 = vadd.f32 %v643, %v672
        %v680 = vadd.f32 %v646, %v672
        %v681 = vadd.f32 %v649, %v672
        %v682 = vadd.f32 %v652, %v672
        %v683 = vadd.f32 %v655, %v672
        %v684 = vadd.f32 %v658, %v672
        %v685 = vadd.f32 %v661, %v672
        %v686 = vadd.f32 %v664, %v672
        %v687 = vadd.f32 %v667, %v672
        %v688 = vadd.f32 %v670, %v672
        %v705 = vlaneseq
        %v706 = vand.u32 %v705, 127
        %v707 = vperm.slane %v673, %v706
        %v708 = vperm.slane %v674, %v706
        %v709 = vperm.slane %v675, %v706
        %v710 = vperm.slane %v676, %v706
        %v711 = vperm.slane %v677, %v706
        %v712 = vperm.slane %v678, %v706
        %v713 = vperm.slane %v679, %v706
        %v714 = vperm.slane %v680, %v706
        %v715 = vperm.slane %v681, %v706
        %v716 = vperm.slane %v682, %v706
        %v717 = vperm.slane %v683, %v706
        %v718 = vperm.slane %v684, %v706
        %v719 = vperm.slane %v685, %v706
        %v720 = vperm.slane %v686, %v706
        %v721 = vperm.slane %v687, %v706
        %v722 = vperm.slane %v688, %v706
        %vm723 = vcmask 1041409
        %v724 = vsel %vm723, %v708, %v707
        %vm725 = vcmask 1042434
        %v726 = vsel %vm725, %v709, %v724
        %vm727 = vcmask 1043459
        %v728 = vsel %vm727, %v710, %v726
        %vm729 = vcmask 1044484
        %v730 = vsel %vm729, %v711, %v728
        %vm731 = vcmask 1045509
        %v732 = vsel %vm731, %v712, %v730
        %vm733 = vcmask 1046534
        %v734 = vsel %vm733, %v713, %v732
        %vm735 = vcmask 1047559
        %v736 = vsel %vm735, %v714, %v734
        %v737 = vsel %vm723, %v716, %v715
        %v738 = vsel %vm725, %v717, %v737
        %v739 = vsel %vm727, %v718, %v738
        %v740 = vsel %vm729, %v719, %v739
        %v741 = vsel %vm731, %v720, %v740
        %v742 = vsel %vm733, %v721, %v741
        %v743 = vsel %vm735, %v722, %v742
        %vm746 = vcmask 64512
        %v747 = vsel %vm746, %v736, -inf
        %748 = vmax.xlane.f32.xlu0 %v747
        %v749 = vpop.xlane.xlu0 %748
        %v750 = vsel %vm746, %v743, -inf
        %751 = vmax.xlane.f32.xlu0 %v750
        %v752 = vpop.xlane.xlu0 %751
        %v755 = vperm.slane %v749, 0
        %v756 = vperm.slane %v749, 1
        %v757 = vperm.slane %v749, 2
        %v758 = vperm.slane %v749, 3
        %v759 = vperm.slane %v749, 4
        %v760 = vperm.slane %v749, 5
        %v761 = vperm.slane %v749, 6
        %v762 = vperm.slane %v749, 7
        %v763 = vperm.slane %v752, 0
        %v764 = vperm.slane %v752, 1
        %v765 = vperm.slane %v752, 2
        %v766 = vperm.slane %v752, 3
        %v767 = vperm.slane %v752, 4
        %v768 = vperm.slane %v752, 5
        %v769 = vperm.slane %v752, 6
        %v770 = vperm.slane %v752, 7
        %v787 = vsub.f32 %v673, %v755
        %v788 = vsub.f32 %v674, %v756
        %v789 = vsub.f32 %v675, %v757
        %v790 = vsub.f32 %v676, %v758
        %v791 = vsub.f32 %v677, %v759
        %v792 = vsub.f32 %v678, %v760
        %v793 = vsub.f32 %v679, %v761
        %v794 = vsub.f32 %v680, %v762
        %v795 = vsub.f32 %v681, %v763
        %v796 = vsub.f32 %v682, %v764
        %v797 = vsub.f32 %v683, %v765
        %v798 = vsub.f32 %v684, %v766
        %v799 = vsub.f32 %v685, %v767
        %v800 = vsub.f32 %v686, %v768
        %v801 = vsub.f32 %v687, %v769
        %v802 = vsub.f32 %v688, %v770
        %v803 = vmul.f32 %v787, 1.442695
        %v804 = vpow.pop %v803
        %v805 = vmul.f32 %v788, 1.442695
        %v806 = vpow.pop %v805
        %v807 = vmul.f32 %v789, 1.442695
        %v808 = vpow.pop %v807
        %v809 = vmul.f32 %v790, 1.442695
        %v810 = vpow.pop %v809
        %v811 = vmul.f32 %v791, 1.442695
        %v812 = vpow.pop %v811
        %v813 = vmul.f32 %v792, 1.442695
        %v814 = vpow.pop %v813
        %v815 = vmul.f32 %v793, 1.442695
        %v816 = vpow.pop %v815
        %v817 = vmul.f32 %v794, 1.442695
        %v818 = vpow.pop %v817
        %v819 = vmul.f32 %v795, 1.442695
        %v820 = vpow.pop %v819
        %v821 = vmul.f32 %v796, 1.442695
        %v822 = vpow.pop %v821
        %v823 = vmul.f32 %v797, 1.442695
        %v824 = vpow.pop %v823
        %v825 = vmul.f32 %v798, 1.442695
        %v826 = vpow.pop %v825
        %v827 = vmul.f32 %v799, 1.442695
        %v828 = vpow.pop %v827
        %v829 = vmul.f32 %v800, 1.442695
        %v830 = vpow.pop %v829
        %v831 = vmul.f32 %v801, 1.442695
        %v832 = vpow.pop %v831
        %v833 = vmul.f32 %v802, 1.442695
        %v834 = vpow.pop %v833
        %851 = vset.pattern.permute.xlu0 0
        %852 = vperm.xlu0 %851, %v804
        %v853 = vpop.permute.xlu0 %852
        %854 = vset.pattern.permute.xlu0 0
        %855 = vperm.xlu0 %854, %v806
        %v856 = vpop.permute.xlu0 %855
        %857 = vset.pattern.permute.xlu0 0
        %858 = vperm.xlu0 %857, %v808
        %v859 = vpop.permute.xlu0 %858
        %860 = vset.pattern.permute.xlu0 0
        %861 = vperm.xlu0 %860, %v810
        %v862 = vpop.permute.xlu0 %861
        %863 = vset.pattern.permute.xlu0 0
        %864 = vperm.xlu0 %863, %v812
        %v865 = vpop.permute.xlu0 %864
        %866 = vset.pattern.permute.xlu0 0
        %867 = vperm.xlu0 %866, %v814
        %v868 = vpop.permute.xlu0 %867
        %869 = vset.pattern.permute.xlu0 0
        %870 = vperm.xlu0 %869, %v816
        %v871 = vpop.permute.xlu0 %870
        %872 = vset.pattern.permute.xlu0 0
        %873 = vperm.xlu0 %872, %v818
        %v874 = vpop.permute.xlu0 %873
        %875 = vset.pattern.permute.xlu0 0
        %876 = vperm.xlu0 %875, %v820
        %v877 = vpop.permute.xlu0 %876
        %878 = vset.pattern.permute.xlu0 0
        %879 = vperm.xlu0 %878, %v822
        %v880 = vpop.permute.xlu0 %879
        %881 = vset.pattern.permute.xlu0 0
        %882 = vperm.xlu0 %881, %v824
        %v883 = vpop.permute.xlu0 %882
        %884 = vset.pattern.permute.xlu0 0
        %885 = vperm.xlu0 %884, %v826
        %v886 = vpop.permute.xlu0 %885
        %887 = vset.pattern.permute.xlu0 0
        %888 = vperm.xlu0 %887, %v828
        %v889 = vpop.permute.xlu0 %888
        %890 = vset.pattern.permute.xlu0 0
        %891 = vperm.xlu0 %890, %v830
        %v892 = vpop.permute.xlu0 %891
        %893 = vset.pattern.permute.xlu0 0
        %894 = vperm.xlu0 %893, %v832
        %v895 = vpop.permute.xlu0 %894
        %896 = vset.pattern.permute.xlu0 0
        %897 = vperm.xlu0 %896, %v834
        %v898 = vpop.permute.xlu0 %897
        %v899 = vperm.slane %v853, %v706
        %v900 = vperm.slane %v856, %v706
        %v901 = vperm.slane %v859, %v706
        %v902 = vperm.slane %v862, %v706
        %v903 = vperm.slane %v865, %v706
        %v904 = vperm.slane %v868, %v706
        %v905 = vperm.slane %v871, %v706
        %v906 = vperm.slane %v874, %v706
        %v907 = vperm.slane %v877, %v706
        %v908 = vperm.slane %v880, %v706
        %v909 = vperm.slane %v883, %v706
        %v910 = vperm.slane %v886, %v706
        %v911 = vperm.slane %v889, %v706
        %v912 = vperm.slane %v892, %v706
        %v913 = vperm.slane %v895, %v706
        %v914 = vperm.slane %v898, %v706
        %v915 = vsel %vm723, %v900, %v899
        %v916 = vsel %vm725, %v901, %v915
        %v917 = vsel %vm727, %v902, %v916
        %v918 = vsel %vm729, %v903, %v917
        %v919 = vsel %vm731, %v904, %v918
        %v920 = vsel %vm733, %v905, %v919
        %v921 = vsel %vm735, %v906, %v920
        %v922 = vsel %vm723, %v908, %v907
        %v923 = vsel %vm725, %v909, %v922
        %v924 = vsel %vm727, %v910, %v923
        %v925 = vsel %vm729, %v911, %v924
        %v926 = vsel %vm731, %v912, %v925
        %v927 = vsel %vm733, %v913, %v926
        %v928 = vsel %vm735, %v914, %v927
        %v931 = vsel %vm746, %v921, 0.0
        %932 = vadd.xlane.f32.xlu0 %v931
        %v933 = vpop.xlane.xlu0 %932
        %v934 = vsel %vm746, %v928, 0.0
        %935 = vadd.xlane.f32.xlu0 %v934
        %v936 = vpop.xlane.xlu0 %935
        %v939 = vperm.slane %v933, 0
        %v940 = vperm.slane %v933, 1
        %v941 = vperm.slane %v933, 2
        %v942 = vperm.slane %v933, 3
        %v943 = vperm.slane %v933, 4
        %v944 = vperm.slane %v933, 5
        %v945 = vperm.slane %v933, 6
        %v946 = vperm.slane %v933, 7
        %v947 = vperm.slane %v936, 0
        %v948 = vperm.slane %v936, 1
        %v949 = vperm.slane %v936, 2
        %v950 = vperm.slane %v936, 3
        %v951 = vperm.slane %v936, 4
        %v952 = vperm.slane %v936, 5
        %v953 = vperm.slane %v936, 6
        %v954 = vperm.slane %v936, 7
        %v971 = vrcp.pop %v939
        %v972 = vmul.f32 %v939, %v971
        %v973 = vsub.f32 1.0, %v972
        %v974 = vmul.f32 %v971, %v973
        %v975 = vadd.f32 %v971, %v974
        %vm976 = vweird.f32 %v939
        %vm977 = vweird.f32 %v971
        %vm978 = vmor %vm976, %vm977
        %v979 = vsel %vm978, %v971, %v975
        %v980 = vand.u32 2147483647, %v939
        %vm981 = vcmp.eq.f32.partialorder %v980, 8.507059e+37
        %v982 = vand.u32 %v939, 2147483648
        %v983 = vor.u32 1.1754944e-38, %v982
        %v984 = vsel %vm981, %v983, %v979
        %v985 = vmul.f32 %v804, %v984
        %v986 = vrcp.pop %v940
        %v987 = vmul.f32 %v940, %v986
        %v988 = vsub.f32 1.0, %v987
        %v989 = vmul.f32 %v986, %v988
        %v990 = vadd.f32 %v986, %v989
        %vm991 = vweird.f32 %v940
        %vm992 = vweird.f32 %v986
        %vm993 = vmor %vm991, %vm992
        %v994 = vsel %vm993, %v986, %v990
        %v995 = vand.u32 2147483647, %v940
        %vm996 = vcmp.eq.f32.partialorder %v995, 8.507059e+37
        %v997 = vand.u32 %v940, 2147483648
        %v998 = vor.u32 1.1754944e-38, %v997
        %v999 = vsel %vm996, %v998, %v994
        %v1000 = vmul.f32 %v806, %v999
        %v1001 = vrcp.pop %v941
        %v1002 = vmul.f32 %v941, %v1001
        %v1003 = vsub.f32 1.0, %v1002
        %v1004 = vmul.f32 %v1001, %v1003
        %v1005 = vadd.f32 %v1001, %v1004
        %vm1006 = vweird.f32 %v941
        %vm1007 = vweird.f32 %v1001
        %vm1008 = vmor %vm1006, %vm1007
        %v1009 = vsel %vm1008, %v1001, %v1005
        %v1010 = vand.u32 2147483647, %v941
        %vm1011 = vcmp.eq.f32.partialorder %v1010, 8.507059e+37
        %v1012 = vand.u32 %v941, 2147483648
        %v1013 = vor.u32 1.1754944e-38, %v1012
        %v1014 = vsel %vm1011, %v1013, %v1009
        %v1015 = vmul.f32 %v808, %v1014
        %v1016 = vrcp.pop %v942
        %v1017 = vmul.f32 %v942, %v1016
        %v1018 = vsub.f32 1.0, %v1017
        %v1019 = vmul.f32 %v1016, %v1018
        %v1020 = vadd.f32 %v1016, %v1019
        %vm1021 = vweird.f32 %v942
        %vm1022 = vweird.f32 %v1016
        %vm1023 = vmor %vm1021, %vm1022
        %v1024 = vsel %vm1023, %v1016, %v1020
        %v1025 = vand.u32 2147483647, %v942
        %vm1026 = vcmp.eq.f32.partialorder %v1025, 8.507059e+37
        %v1027 = vand.u32 %v942, 2147483648
        %v1028 = vor.u32 1.1754944e-38, %v1027
        %v1029 = vsel %vm1026, %v1028, %v1024
        %v1030 = vmul.f32 %v810, %v1029
        %v1031 = vrcp.pop %v943
        %v1032 = vmul.f32 %v943, %v1031
        %v1033 = vsub.f32 1.0, %v1032
        %v1034 = vmul.f32 %v1031, %v1033
        %v1035 = vadd.f32 %v1031, %v1034
        %vm1036 = vweird.f32 %v943
        %vm1037 = vweird.f32 %v1031
        %vm1038 = vmor %vm1036, %vm1037
        %v1039 = vsel %vm1038, %v1031, %v1035
        %v1040 = vand.u32 2147483647, %v943
        %vm1041 = vcmp.eq.f32.partialorder %v1040, 8.507059e+37
        %v1042 = vand.u32 %v943, 2147483648
        %v1043 = vor.u32 1.1754944e-38, %v1042
        %v1044 = vsel %vm1041, %v1043, %v1039
        %v1045 = vmul.f32 %v812, %v1044
        %v1046 = vrcp.pop %v944
        %v1047 = vmul.f32 %v944, %v1046
        %v1048 = vsub.f32 1.0, %v1047
        %v1049 = vmul.f32 %v1046, %v1048
        %v1050 = vadd.f32 %v1046, %v1049
        %vm1051 = vweird.f32 %v944
        %vm1052 = vweird.f32 %v1046
        %vm1053 = vmor %vm1051, %vm1052
        %v1054 = vsel %vm1053, %v1046, %v1050
        %v1055 = vand.u32 2147483647, %v944
        %vm1056 = vcmp.eq.f32.partialorder %v1055, 8.507059e+37
        %v1057 = vand.u32 %v944, 2147483648
        %v1058 = vor.u32 1.1754944e-38, %v1057
        %v1059 = vsel %vm1056, %v1058, %v1054
        %v1060 = vmul.f32 %v814, %v1059
        %v1061 = vrcp.pop %v945
        %v1062 = vmul.f32 %v945, %v1061
        %v1063 = vsub.f32 1.0, %v1062
        %v1064 = vmul.f32 %v1061, %v1063
        %v1065 = vadd.f32 %v1061, %v1064
        %vm1066 = vweird.f32 %v945
        %vm1067 = vweird.f32 %v1061
        %vm1068 = vmor %vm1066, %vm1067
        %v1069 = vsel %vm1068, %v1061, %v1065
        %v1070 = vand.u32 2147483647, %v945
        %vm1071 = vcmp.eq.f32.partialorder %v1070, 8.507059e+37
        %v1072 = vand.u32 %v945, 2147483648
        %v1073 = vor.u32 1.1754944e-38, %v1072
        %v1074 = vsel %vm1071, %v1073, %v1069
        %v1075 = vmul.f32 %v816, %v1074
        %v1076 = vrcp.pop %v946
        %v1077 = vmul.f32 %v946, %v1076
        %v1078 = vsub.f32 1.0, %v1077
        %v1079 = vmul.f32 %v1076, %v1078
        %v1080 = vadd.f32 %v1076, %v1079
        %vm1081 = vweird.f32 %v946
        %vm1082 = vweird.f32 %v1076
        %vm1083 = vmor %vm1081, %vm1082
        %v1084 = vsel %vm1083, %v1076, %v1080
        %v1085 = vand.u32 2147483647, %v946
        %vm1086 = vcmp.eq.f32.partialorder %v1085, 8.507059e+37
        %v1087 = vand.u32 %v946, 2147483648
        %v1088 = vor.u32 1.1754944e-38, %v1087
        %v1089 = vsel %vm1086, %v1088, %v1084
        %v1090 = vmul.f32 %v818, %v1089
        %v1091 = vrcp.pop %v947
        %v1092 = vmul.f32 %v947, %v1091
        %v1093 = vsub.f32 1.0, %v1092
        %v1094 = vmul.f32 %v1091, %v1093
        %v1095 = vadd.f32 %v1091, %v1094
        %vm1096 = vweird.f32 %v947
        %vm1097 = vweird.f32 %v1091
        %vm1098 = vmor %vm1096, %vm1097
        %v1099 = vsel %vm1098, %v1091, %v1095
        %v1100 = vand.u32 2147483647, %v947
        %vm1101 = vcmp.eq.f32.partialorder %v1100, 8.507059e+37
        %v1102 = vand.u32 %v947, 2147483648
        %v1103 = vor.u32 1.1754944e-38, %v1102
        %v1104 = vsel %vm1101, %v1103, %v1099
        %v1105 = vmul.f32 %v820, %v1104
        %v1106 = vrcp.pop %v948
        %v1107 = vmul.f32 %v948, %v1106
        %v1108 = vsub.f32 1.0, %v1107
        %v1109 = vmul.f32 %v1106, %v1108
        %v1110 = vadd.f32 %v1106, %v1109
        %vm1111 = vweird.f32 %v948
        %vm1112 = vweird.f32 %v1106
        %vm1113 = vmor %vm1111, %vm1112
        %v1114 = vsel %vm1113, %v1106, %v1110
        %v1115 = vand.u32 2147483647, %v948
        %vm1116 = vcmp.eq.f32.partialorder %v1115, 8.507059e+37
        %v1117 = vand.u32 %v948, 2147483648
        %v1118 = vor.u32 1.1754944e-38, %v1117
        %v1119 = vsel %vm1116, %v1118, %v1114
        %v1120 = vmul.f32 %v822, %v1119
        %v1121 = vrcp.pop %v949
        %v1122 = vmul.f32 %v949, %v1121
        %v1123 = vsub.f32 1.0, %v1122
        %v1124 = vmul.f32 %v1121, %v1123
        %v1125 = vadd.f32 %v1121, %v1124
        %vm1126 = vweird.f32 %v949
        %vm1127 = vweird.f32 %v1121
        %vm1128 = vmor %vm1126, %vm1127
        %v1129 = vsel %vm1128, %v1121, %v1125
        %v1130 = vand.u32 2147483647, %v949
        %vm1131 = vcmp.eq.f32.partialorder %v1130, 8.507059e+37
        %v1132 = vand.u32 %v949, 2147483648
        %v1133 = vor.u32 1.1754944e-38, %v1132
        %v1134 = vsel %vm1131, %v1133, %v1129
        %v1135 = vmul.f32 %v824, %v1134
        %v1136 = vrcp.pop %v950
        %v1137 = vmul.f32 %v950, %v1136
        %v1138 = vsub.f32 1.0, %v1137
        %v1139 = vmul.f32 %v1136, %v1138
        %v1140 = vadd.f32 %v1136, %v1139
        %vm1141 = vweird.f32 %v950
        %vm1142 = vweird.f32 %v1136
        %vm1143 = vmor %vm1141, %vm1142
        %v1144 = vsel %vm1143, %v1136, %v1140
        %v1145 = vand.u32 2147483647, %v950
        %vm1146 = vcmp.eq.f32.partialorder %v1145, 8.507059e+37
        %v1147 = vand.u32 %v950, 2147483648
        %v1148 = vor.u32 1.1754944e-38, %v1147
        %v1149 = vsel %vm1146, %v1148, %v1144
        %v1150 = vmul.f32 %v826, %v1149
        %v1151 = vrcp.pop %v951
        %v1152 = vmul.f32 %v951, %v1151
        %v1153 = vsub.f32 1.0, %v1152
        %v1154 = vmul.f32 %v1151, %v1153
        %v1155 = vadd.f32 %v1151, %v1154
        %vm1156 = vweird.f32 %v951
        %vm1157 = vweird.f32 %v1151
        %vm1158 = vmor %vm1156, %vm1157
        %v1159 = vsel %vm1158, %v1151, %v1155
        %v1160 = vand.u32 2147483647, %v951
        %vm1161 = vcmp.eq.f32.partialorder %v1160, 8.507059e+37
        %v1162 = vand.u32 %v951, 2147483648
        %v1163 = vor.u32 1.1754944e-38, %v1162
        %v1164 = vsel %vm1161, %v1163, %v1159
        %v1165 = vmul.f32 %v828, %v1164
        %v1166 = vrcp.pop %v952
        %v1167 = vmul.f32 %v952, %v1166
        %v1168 = vsub.f32 1.0, %v1167
        %v1169 = vmul.f32 %v1166, %v1168
        %v1170 = vadd.f32 %v1166, %v1169
        %vm1171 = vweird.f32 %v952
        %vm1172 = vweird.f32 %v1166
        %vm1173 = vmor %vm1171, %vm1172
        %v1174 = vsel %vm1173, %v1166, %v1170
        %v1175 = vand.u32 2147483647, %v952
        %vm1176 = vcmp.eq.f32.partialorder %v1175, 8.507059e+37
        %v1177 = vand.u32 %v952, 2147483648
        %v1178 = vor.u32 1.1754944e-38, %v1177
        %v1179 = vsel %vm1176, %v1178, %v1174
        %v1180 = vmul.f32 %v830, %v1179
        %v1181 = vrcp.pop %v953
        %v1182 = vmul.f32 %v953, %v1181
        %v1183 = vsub.f32 1.0, %v1182
        %v1184 = vmul.f32 %v1181, %v1183
        %v1185 = vadd.f32 %v1181, %v1184
        %vm1186 = vweird.f32 %v953
        %vm1187 = vweird.f32 %v1181
        %vm1188 = vmor %vm1186, %vm1187
        %v1189 = vsel %vm1188, %v1181, %v1185
        %v1190 = vand.u32 2147483647, %v953
        %vm1191 = vcmp.eq.f32.partialorder %v1190, 8.507059e+37
        %v1192 = vand.u32 %v953, 2147483648
        %v1193 = vor.u32 1.1754944e-38, %v1192
        %v1194 = vsel %vm1191, %v1193, %v1189
        %v1195 = vmul.f32 %v832, %v1194
        %v1196 = vrcp.pop %v954
        %v1197 = vmul.f32 %v954, %v1196
        %v1198 = vsub.f32 1.0, %v1197
        %v1199 = vmul.f32 %v1196, %v1198
        %v1200 = vadd.f32 %v1196, %v1199
        %vm1201 = vweird.f32 %v954
        %vm1202 = vweird.f32 %v1196
        %vm1203 = vmor %vm1201, %vm1202
        %v1204 = vsel %vm1203, %v1196, %v1200
        %v1205 = vand.u32 2147483647, %v954
        %vm1206 = vcmp.eq.f32.partialorder %v1205, 8.507059e+37
        %v1207 = vand.u32 %v954, 2147483648
        %v1208 = vor.u32 1.1754944e-38, %v1207
        %v1209 = vsel %vm1206, %v1208, %v1204
        %v1210 = vmul.f32 %v834, %v1209
        %v1213 = vperm.slane %v482, 0
        %v1214 = vlaneseq
        %v1215 = vshrl.u32 %v1214, 7
        %1217 = vset.pattern.permute.xlu0 %v1215
        %1218 = vperm.xlu0 %1217, %v1213
        %v1219 = vpop.permute.xlu0 %1218
        %v1220 = vperm.slane %v482, 1
        %v1221 = vlaneseq
        %v1222 = vshrl.u32 %v1221, 7
        %1224 = vset.pattern.permute.xlu0 %v1222
        %1225 = vperm.xlu0 %1224, %v1220
        %v1226 = vpop.permute.xlu0 %1225
        %v1227 = vperm.slane %v482, 2
        %v1228 = vlaneseq
        %v1229 = vshrl.u32 %v1228, 7
        %1231 = vset.pattern.permute.xlu0 %v1229
        %1232 = vperm.xlu0 %1231, %v1227
        %v1233 = vpop.permute.xlu0 %1232
        %v1234 = vperm.slane %v482, 3
        %v1235 = vlaneseq
        %v1236 = vshrl.u32 %v1235, 7
        %1238 = vset.pattern.permute.xlu0 %v1236
        %1239 = vperm.xlu0 %1238, %v1234
        %v1240 = vpop.permute.xlu0 %1239
        %v1241 = vperm.slane %v482, 4
        %v1242 = vlaneseq
        %v1243 = vshrl.u32 %v1242, 7
        %1245 = vset.pattern.permute.xlu0 %v1243
        %1246 = vperm.xlu0 %1245, %v1241
        %v1247 = vpop.permute.xlu0 %1246
        %v1248 = vperm.slane %v482, 5
        %v1249 = vlaneseq
        %v1250 = vshrl.u32 %v1249, 7
        %1252 = vset.pattern.permute.xlu0 %v1250
        %1253 = vperm.xlu0 %1252, %v1248
        %v1254 = vpop.permute.xlu0 %1253
        %v1255 = vperm.slane %v482, 6
        %v1256 = vlaneseq
        %v1257 = vshrl.u32 %v1256, 7
        %1259 = vset.pattern.permute.xlu0 %v1257
        %1260 = vperm.xlu0 %1259, %v1255
        %v1261 = vpop.permute.xlu0 %1260
        %v1262 = vperm.slane %v482, 7
        %v1263 = vlaneseq
        %v1264 = vshrl.u32 %v1263, 7
        %1266 = vset.pattern.permute.xlu0 %v1264
        %1267 = vperm.xlu0 %1266, %v1262
        %v1268 = vpop.permute.xlu0 %1267
        %v1269 = vperm.slane %v483, 0
        %v1270 = vlaneseq
        %v1271 = vshrl.u32 %v1270, 7
        %1273 = vset.pattern.permute.xlu0 %v1271
        %1274 = vperm.xlu0 %1273, %v1269
        %v1275 = vpop.permute.xlu0 %1274
        %v1276 = vperm.slane %v483, 1
        %v1277 = vlaneseq
        %v1278 = vshrl.u32 %v1277, 7
        %1280 = vset.pattern.permute.xlu0 %v1278
        %1281 = vperm.xlu0 %1280, %v1276
        %v1282 = vpop.permute.xlu0 %1281
        %v1283 = vperm.slane %v483, 2
        %v1284 = vlaneseq
        %v1285 = vshrl.u32 %v1284, 7
        %1287 = vset.pattern.permute.xlu0 %v1285
        %1288 = vperm.xlu0 %1287, %v1283
        %v1289 = vpop.permute.xlu0 %1288
        %v1290 = vperm.slane %v483, 3
        %v1291 = vlaneseq
        %v1292 = vshrl.u32 %v1291, 7
        %1294 = vset.pattern.permute.xlu0 %v1292
        %1295 = vperm.xlu0 %1294, %v1290
        %v1296 = vpop.permute.xlu0 %1295
        %v1297 = vperm.slane %v483, 4
        %v1298 = vlaneseq
        %v1299 = vshrl.u32 %v1298, 7
        %1301 = vset.pattern.permute.xlu0 %v1299
        %1302 = vperm.xlu0 %1301, %v1297
        %v1303 = vpop.permute.xlu0 %1302
        %v1304 = vperm.slane %v483, 5
        %v1305 = vlaneseq
        %v1306 = vshrl.u32 %v1305, 7
        %1308 = vset.pattern.permute.xlu0 %v1306
        %1309 = vperm.xlu0 %1308, %v1304
        %v1310 = vpop.permute.xlu0 %1309
        %v1311 = vperm.slane %v483, 6
        %v1312 = vlaneseq
        %v1313 = vshrl.u32 %v1312, 7
        %1315 = vset.pattern.permute.xlu0 %v1313
        %1316 = vperm.xlu0 %1315, %v1311
        %v1317 = vpop.permute.xlu0 %1316
        %v1318 = vperm.slane %v483, 7
        %v1319 = vlaneseq
        %v1320 = vshrl.u32 %v1319, 7
        %1322 = vset.pattern.permute.xlu0 %v1320
        %1323 = vperm.xlu0 %1322, %v1318
        %v1324 = vpop.permute.xlu0 %1323
        %v1341 = vmul.f32 %v985, %v1219
        %v1342 = vmul.f32 %v1000, %v1226
        %v1343 = vmul.f32 %v1015, %v1233
        %v1344 = vmul.f32 %v1030, %v1240
        %v1345 = vmul.f32 %v1045, %v1247
        %v1346 = vmul.f32 %v1060, %v1254
        %v1347 = vmul.f32 %v1075, %v1261
        %v1348 = vmul.f32 %v1090, %v1268
        %v1349 = vmul.f32 %v1105, %v1275
        %v1350 = vmul.f32 %v1120, %v1282
        %v1351 = vmul.f32 %v1135, %v1289
        %v1352 = vmul.f32 %v1150, %v1296
        %v1353 = vmul.f32 %v1165, %v1303
        %v1354 = vmul.f32 %v1180, %v1310
        %v1355 = vmul.f32 %v1195, %v1317
        %v1356 = vmul.f32 %v1210, %v1324
        %1373 = vset.pattern.permute.xlu0 0
        %1374 = vperm.xlu0 %1373, %v1341
        %v1375 = vpop.permute.xlu0 %1374
        %1376 = vset.pattern.permute.xlu0 0
        %1377 = vperm.xlu0 %1376, %v1342
        %v1378 = vpop.permute.xlu0 %1377
        %1379 = vset.pattern.permute.xlu0 0
        %1380 = vperm.xlu0 %1379, %v1343
        %v1381 = vpop.permute.xlu0 %1380
        %1382 = vset.pattern.permute.xlu0 0
        %1383 = vperm.xlu0 %1382, %v1344
        %v1384 = vpop.permute.xlu0 %1383
        %1385 = vset.pattern.permute.xlu0 0
        %1386 = vperm.xlu0 %1385, %v1345
        %v1387 = vpop.permute.xlu0 %1386
        %1388 = vset.pattern.permute.xlu0 0
        %1389 = vperm.xlu0 %1388, %v1346
        %v1390 = vpop.permute.xlu0 %1389
        %1391 = vset.pattern.permute.xlu0 0
        %1392 = vperm.xlu0 %1391, %v1347
        %v1393 = vpop.permute.xlu0 %1392
        %1394 = vset.pattern.permute.xlu0 0
        %1395 = vperm.xlu0 %1394, %v1348
        %v1396 = vpop.permute.xlu0 %1395
        %1397 = vset.pattern.permute.xlu0 0
        %1398 = vperm.xlu0 %1397, %v1349
        %v1399 = vpop.permute.xlu0 %1398
        %1400 = vset.pattern.permute.xlu0 0
        %1401 = vperm.xlu0 %1400, %v1350
        %v1402 = vpop.permute.xlu0 %1401
        %1403 = vset.pattern.permute.xlu0 0
        %1404 = vperm.xlu0 %1403, %v1351
        %v1405 = vpop.permute.xlu0 %1404
        %1406 = vset.pattern.permute.xlu0 0
        %1407 = vperm.xlu0 %1406, %v1352
        %v1408 = vpop.permute.xlu0 %1407
        %1409 = vset.pattern.permute.xlu0 0
        %1410 = vperm.xlu0 %1409, %v1353
        %v1411 = vpop.permute.xlu0 %1410
        %1412 = vset.pattern.permute.xlu0 0
        %1413 = vperm.xlu0 %1412, %v1354
        %v1414 = vpop.permute.xlu0 %1413
        %1415 = vset.pattern.permute.xlu0 0
        %1416 = vperm.xlu0 %1415, %v1355
        %v1417 = vpop.permute.xlu0 %1416
        %1418 = vset.pattern.permute.xlu0 0
        %1419 = vperm.xlu0 %1418, %v1356
        %v1420 = vpop.permute.xlu0 %1419
        %v1421 = vperm.slane %v1375, %v706
        %v1422 = vperm.slane %v1378, %v706
        %v1423 = vperm.slane %v1381, %v706
        %v1424 = vperm.slane %v1384, %v706
        %v1425 = vperm.slane %v1387, %v706
        %v1426 = vperm.slane %v1390, %v706
        %v1427 = vperm.slane %v1393, %v706
        %v1428 = vperm.slane %v1396, %v706
        %v1429 = vperm.slane %v1399, %v706
        %v1430 = vperm.slane %v1402, %v706
        %v1431 = vperm.slane %v1405, %v706
        %v1432 = vperm.slane %v1408, %v706
        %v1433 = vperm.slane %v1411, %v706
        %v1434 = vperm.slane %v1414, %v706
        %v1435 = vperm.slane %v1417, %v706
        %v1436 = vperm.slane %v1420, %v706
        %v1437 = vsel %vm723, %v1422, %v1421
        %v1438 = vsel %vm725, %v1423, %v1437
        %v1439 = vsel %vm727, %v1424, %v1438
        %v1440 = vsel %vm729, %v1425, %v1439
        %v1441 = vsel %vm731, %v1426, %v1440
        %v1442 = vsel %vm733, %v1427, %v1441
        %v1443 = vsel %vm735, %v1428, %v1442
        %v1444 = vsel %vm723, %v1430, %v1429
        %v1445 = vsel %vm725, %v1431, %v1444
        %v1446 = vsel %vm727, %v1432, %v1445
        %v1447 = vsel %vm729, %v1433, %v1446
        %v1448 = vsel %vm731, %v1434, %v1447
        %v1449 = vsel %vm733, %v1435, %v1448
        %v1450 = vsel %vm735, %v1436, %v1449
        %1453 = vst.msk [vmem:[%s447] sm:$0xff] %vm746, %v1443
        %1454 = vst.msk [vmem:[%s447 + $0x8] sm:$0xff] %vm746, %v1450
        %v1455 = vsel %vm746, %v1421, 0
        %1457 = vmatpush.msra.mxu0 0.0
        %1458 = vmatpush.msra.mxu0 0.0
        %1459 = vmatpush.msra.mxu0 0.0
        %1460 = vmatpush.msra.mxu0 0.0
        %1461 = vmatpush.msra.mxu0 0.0
        %1462 = vmatpush.msra.mxu0 0.0
        %1463 = vmatpush.msra.mxu0 0.0
        %1464 = vmatpush.msra.mxu0 0.0
        %1465 = vmatpush.msra.mxu0 0.0
        %1466 = vmatpush.msra.mxu0 0.0
        %1467 = vmatpush.msra.mxu0 0.0
        %1468 = vmatpush.msra.mxu0 0.0
        %1469 = vmatpush.msra.mxu0 0.0
        %1470 = vmatpush.msra.mxu0 0.0
        %1471 = vmatpush.msra.mxu0 0.0
        %1472 = vmatpush.msra.mxu0 %v466
        %1473 = vmatmul.f32.gmra.mxu0 %v1455
        %v1474 = vpop.f32.mrf.mxu0
        %v1475 = vadd.f32 0.0, %v1474
        %1476 = vdwg.mxu0
        %v1477 = vsel %vm746, %v1422, 0
        %1479 = vmatpush.msra.mxu0 0.0
        %1480 = vmatpush.msra.mxu0 0.0
        %1481 = vmatpush.msra.mxu0 0.0
        %1482 = vmatpush.msra.mxu0 0.0
        %1483 = vmatpush.msra.mxu0 0.0
        %1484 = vmatpush.msra.mxu0 0.0
        %1485 = vmatpush.msra.mxu0 0.0
        %1486 = vmatpush.msra.mxu0 0.0
        %1487 = vmatpush.msra.mxu0 0.0
        %1488 = vmatpush.msra.mxu0 0.0
        %1489 = vmatpush.msra.mxu0 0.0
        %1490 = vmatpush.msra.mxu0 0.0
        %1491 = vmatpush.msra.mxu0 0.0
        %1492 = vmatpush.msra.mxu0 0.0
        %1493 = vmatpush.msra.mxu0 0.0
        %1494 = vmatpush.msra.mxu0 %v467
        %1495 = vmatmul.f32.gmra.mxu0 %v1477
        %v1496 = vpop.f32.mrf.mxu0
        %v1497 = vadd.f32 0.0, %v1496
        %1498 = vdwg.mxu0
        %v1499 = vsel %vm746, %v1423, 0
        %1501 = vmatpush.msra.mxu0 0.0
        %1502 = vmatpush.msra.mxu0 0.0
        %1503 = vmatpush.msra.mxu0 0.0
        %1504 = vmatpush.msra.mxu0 0.0
        %1505 = vmatpush.msra.mxu0 0.0
        %1506 = vmatpush.msra.mxu0 0.0
        %1507 = vmatpush.msra.mxu0 0.0
        %1508 = vmatpush.msra.mxu0 0.0
        %1509 = vmatpush.msra.mxu0 0.0
        %1510 = vmatpush.msra.mxu0 0.0
        %1511 = vmatpush.msra.mxu0 0.0
        %1512 = vmatpush.msra.mxu0 0.0
        %1513 = vmatpush.msra.mxu0 0.0
        %1514 = vmatpush.msra.mxu0 0.0
        %1515 = vmatpush.msra.mxu0 0.0
        %1516 = vmatpush.msra.mxu0 %v468
        %1517 = vmatmul.f32.gmra.mxu0 %v1499
        %v1518 = vpop.f32.mrf.mxu0
        %v1519 = vadd.f32 0.0, %v1518
        %1520 = vdwg.mxu0
        %v1521 = vsel %vm746, %v1424, 0
        %1523 = vmatpush.msra.mxu0 0.0
        %1524 = vmatpush.msra.mxu0 0.0
        %1525 = vmatpush.msra.mxu0 0.0
        %1526 = vmatpush.msra.mxu0 0.0
        %1527 = vmatpush.msra.mxu0 0.0
        %1528 = vmatpush.msra.mxu0 0.0
        %1529 = vmatpush.msra.mxu0 0.0
        %1530 = vmatpush.msra.mxu0 0.0
        %1531 = vmatpush.msra.mxu0 0.0
        %1532 = vmatpush.msra.mxu0 0.0
        %1533 = vmatpush.msra.mxu0 0.0
        %1534 = vmatpush.msra.mxu0 0.0
        %1535 = vmatpush.msra.mxu0 0.0
        %1536 = vmatpush.msra.mxu0 0.0
        %1537 = vmatpush.msra.mxu0 0.0
        %1538 = vmatpush.msra.mxu0 %v469
        %1539 = vmatmul.f32.gmra.mxu0 %v1521
        %v1540 = vpop.f32.mrf.mxu0
        %v1541 = vadd.f32 0.0, %v1540
        %1542 = vdwg.mxu0
        %v1543 = vsel %vm746, %v1425, 0
        %1545 = vmatpush.msra.mxu0 0.0
        %1546 = vmatpush.msra.mxu0 0.0
        %1547 = vmatpush.msra.mxu0 0.0
        %1548 = vmatpush.msra.mxu0 0.0
        %1549 = vmatpush.msra.mxu0 0.0
        %1550 = vmatpush.msra.mxu0 0.0
        %1551 = vmatpush.msra.mxu0 0.0
        %1552 = vmatpush.msra.mxu0 0.0
        %1553 = vmatpush.msra.mxu0 0.0
        %1554 = vmatpush.msra.mxu0 0.0
        %1555 = vmatpush.msra.mxu0 0.0
        %1556 = vmatpush.msra.mxu0 0.0
        %1557 = vmatpush.msra.mxu0 0.0
        %1558 = vmatpush.msra.mxu0 0.0
        %1559 = vmatpush.msra.mxu0 0.0
        %1560 = vmatpush.msra.mxu0 %v470
        %1561 = vmatmul.f32.gmra.mxu0 %v1543
        %v1562 = vpop.f32.mrf.mxu0
        %v1563 = vadd.f32 0.0, %v1562
        %1564 = vdwg.mxu0
        %v1565 = vsel %vm746, %v1426, 0
        %1567 = vmatpush.msra.mxu0 0.0
        %1568 = vmatpush.msra.mxu0 0.0
        %1569 = vmatpush.msra.mxu0 0.0
        %1570 = vmatpush.msra.mxu0 0.0
        %1571 = vmatpush.msra.mxu0 0.0
        %1572 = vmatpush.msra.mxu0 0.0
        %1573 = vmatpush.msra.mxu0 0.0
        %1574 = vmatpush.msra.mxu0 0.0
        %1575 = vmatpush.msra.mxu0 0.0
        %1576 = vmatpush.msra.mxu0 0.0
        %1577 = vmatpush.msra.mxu0 0.0
        %1578 = vmatpush.msra.mxu0 0.0
        %1579 = vmatpush.msra.mxu0 0.0
        %1580 = vmatpush.msra.mxu0 0.0
        %1581 = vmatpush.msra.mxu0 0.0
        %1582 = vmatpush.msra.mxu0 %v471
        %1583 = vmatmul.f32.gmra.mxu0 %v1565
        %v1584 = vpop.f32.mrf.mxu0
        %v1585 = vadd.f32 0.0, %v1584
        %1586 = vdwg.mxu0
        %v1587 = vsel %vm746, %v1427, 0
        %1589 = vmatpush.msra.mxu0 0.0
        %1590 = vmatpush.msra.mxu0 0.0
        %1591 = vmatpush.msra.mxu0 0.0
        %1592 = vmatpush.msra.mxu0 0.0
        %1593 = vmatpush.msra.mxu0 0.0
        %1594 = vmatpush.msra.mxu0 0.0
        %1595 = vmatpush.msra.mxu0 0.0
        %1596 = vmatpush.msra.mxu0 0.0
        %1597 = vmatpush.msra.mxu0 0.0
        %1598 = vmatpush.msra.mxu0 0.0
        %1599 = vmatpush.msra.mxu0 0.0
        %1600 = vmatpush.msra.mxu0 0.0
        %1601 = vmatpush.msra.mxu0 0.0
        %1602 = vmatpush.msra.mxu0 0.0
        %1603 = vmatpush.msra.mxu0 0.0
        %1604 = vmatpush.msra.mxu0 %v472
        %1605 = vmatmul.f32.gmra.mxu0 %v1587
        %v1606 = vpop.f32.mrf.mxu0
        %v1607 = vadd.f32 0.0, %v1606
        %1608 = vdwg.mxu0
        %v1609 = vsel %vm746, %v1428, 0
        %1611 = vmatpush.msra.mxu0 0.0
        %1612 = vmatpush.msra.mxu0 0.0
        %1613 = vmatpush.msra.mxu0 0.0
        %1614 = vmatpush.msra.mxu0 0.0
        %1615 = vmatpush.msra.mxu0 0.0
        %1616 = vmatpush.msra.mxu0 0.0
        %1617 = vmatpush.msra.mxu0 0.0
        %1618 = vmatpush.msra.mxu0 0.0
        %1619 = vmatpush.msra.mxu0 0.0
        %1620 = vmatpush.msra.mxu0 0.0
        %1621 = vmatpush.msra.mxu0 0.0
        %1622 = vmatpush.msra.mxu0 0.0
        %1623 = vmatpush.msra.mxu0 0.0
        %1624 = vmatpush.msra.mxu0 0.0
        %1625 = vmatpush.msra.mxu0 0.0
        %1626 = vmatpush.msra.mxu0 %v473
        %1627 = vmatmul.f32.gmra.mxu0 %v1609
        %v1628 = vpop.f32.mrf.mxu0
        %v1629 = vadd.f32 0.0, %v1628
        %1630 = vdwg.mxu0
        %v1631 = vsel %vm746, %v1429, 0
        %1633 = vmatpush.msra.mxu0 0.0
        %1634 = vmatpush.msra.mxu0 0.0
        %1635 = vmatpush.msra.mxu0 0.0
        %1636 = vmatpush.msra.mxu0 0.0
        %1637 = vmatpush.msra.mxu0 0.0
        %1638 = vmatpush.msra.mxu0 0.0
        %1639 = vmatpush.msra.mxu0 0.0
        %1640 = vmatpush.msra.mxu0 0.0
        %1641 = vmatpush.msra.mxu0 0.0
        %1642 = vmatpush.msra.mxu0 0.0
        %1643 = vmatpush.msra.mxu0 0.0
        %1644 = vmatpush.msra.mxu0 0.0
        %1645 = vmatpush.msra.mxu0 0.0
        %1646 = vmatpush.msra.mxu0 0.0
        %1647 = vmatpush.msra.mxu0 0.0
        %1648 = vmatpush.msra.mxu0 %v474
        %1649 = vmatmul.f32.gmra.mxu0 %v1631
        %v1650 = vpop.f32.mrf.mxu0
        %v1651 = vadd.f32 0.0, %v1650
        %1652 = vdwg.mxu0
        %v1653 = vsel %vm746, %v1430, 0
        %1655 = vmatpush.msra.mxu0 0.0
        %1656 = vmatpush.msra.mxu0 0.0
        %1657 = vmatpush.msra.mxu0 0.0
        %1658 = vmatpush.msra.mxu0 0.0
        %1659 = vmatpush.msra.mxu0 0.0
        %1660 = vmatpush.msra.mxu0 0.0
        %1661 = vmatpush.msra.mxu0 0.0
        %1662 = vmatpush.msra.mxu0 0.0
        %1663 = vmatpush.msra.mxu0 0.0
        %1664 = vmatpush.msra.mxu0 0.0
        %1665 = vmatpush.msra.mxu0 0.0
        %1666 = vmatpush.msra.mxu0 0.0
        %1667 = vmatpush.msra.mxu0 0.0
        %1668 = vmatpush.msra.mxu0 0.0
        %1669 = vmatpush.msra.mxu0 0.0
        %1670 = vmatpush.msra.mxu0 %v475
        %1671 = vmatmul.f32.gmra.mxu0 %v1653
        %v1672 = vpop.f32.mrf.mxu0
        %v1673 = vadd.f32 0.0, %v1672
        %1674 = vdwg.mxu0
        %v1675 = vsel %vm746, %v1431, 0
        %1677 = vmatpush.msra.mxu0 0.0
        %1678 = vmatpush.msra.mxu0 0.0
        %1679 = vmatpush.msra.mxu0 0.0
        %1680 = vmatpush.msra.mxu0 0.0
        %1681 = vmatpush.msra.mxu0 0.0
        %1682 = vmatpush.msra.mxu0 0.0
        %1683 = vmatpush.msra.mxu0 0.0
        %1684 = vmatpush.msra.mxu0 0.0
        %1685 = vmatpush.msra.mxu0 0.0
        %1686 = vmatpush.msra.mxu0 0.0
        %1687 = vmatpush.msra.mxu0 0.0
        %1688 = vmatpush.msra.mxu0 0.0
        %1689 = vmatpush.msra.mxu0 0.0
        %1690 = vmatpush.msra.mxu0 0.0
        %1691 = vmatpush.msra.mxu0 0.0
        %1692 = vmatpush.msra.mxu0 %v476
        %1693 = vmatmul.f32.gmra.mxu0 %v1675
        %v1694 = vpop.f32.mrf.mxu0
        %v1695 = vadd.f32 0.0, %v1694
        %1696 = vdwg.mxu0
        %v1697 = vsel %vm746, %v1432, 0
        %1699 = vmatpush.msra.mxu0 0.0
        %1700 = vmatpush.msra.mxu0 0.0
        %1701 = vmatpush.msra.mxu0 0.0
        %1702 = vmatpush.msra.mxu0 0.0
        %1703 = vmatpush.msra.mxu0 0.0
        %1704 = vmatpush.msra.mxu0 0.0
        %1705 = vmatpush.msra.mxu0 0.0
        %1706 = vmatpush.msra.mxu0 0.0
        %1707 = vmatpush.msra.mxu0 0.0
        %1708 = vmatpush.msra.mxu0 0.0
        %1709 = vmatpush.msra.mxu0 0.0
        %1710 = vmatpush.msra.mxu0 0.0
        %1711 = vmatpush.msra.mxu0 0.0
        %1712 = vmatpush.msra.mxu0 0.0
        %1713 = vmatpush.msra.mxu0 0.0
        %1714 = vmatpush.msra.mxu0 %v477
        %1715 = vmatmul.f32.gmra.mxu0 %v1697
        %v1716 = vpop.f32.mrf.mxu0
        %v1717 = vadd.f32 0.0, %v1716
        %1718 = vdwg.mxu0
        %v1719 = vsel %vm746, %v1433, 0
        %1721 = vmatpush.msra.mxu0 0.0
        %1722 = vmatpush.msra.mxu0 0.0
        %1723 = vmatpush.msra.mxu0 0.0
        %1724 = vmatpush.msra.mxu0 0.0
        %1725 = vmatpush.msra.mxu0 0.0
        %1726 = vmatpush.msra.mxu0 0.0
        %1727 = vmatpush.msra.mxu0 0.0
        %1728 = vmatpush.msra.mxu0 0.0
        %1729 = vmatpush.msra.mxu0 0.0
        %1730 = vmatpush.msra.mxu0 0.0
        %1731 = vmatpush.msra.mxu0 0.0
        %1732 = vmatpush.msra.mxu0 0.0
        %1733 = vmatpush.msra.mxu0 0.0
        %1734 = vmatpush.msra.mxu0 0.0
        %1735 = vmatpush.msra.mxu0 0.0
        %1736 = vmatpush.msra.mxu0 %v478
        %1737 = vmatmul.f32.gmra.mxu0 %v1719
        %v1738 = vpop.f32.mrf.mxu0
        %v1739 = vadd.f32 0.0, %v1738
        %1740 = vdwg.mxu0
        %v1741 = vsel %vm746, %v1434, 0
        %1743 = vmatpush.msra.mxu0 0.0
        %1744 = vmatpush.msra.mxu0 0.0
        %1745 = vmatpush.msra.mxu0 0.0
        %1746 = vmatpush.msra.mxu0 0.0
        %1747 = vmatpush.msra.mxu0 0.0
        %1748 = vmatpush.msra.mxu0 0.0
        %1749 = vmatpush.msra.mxu0 0.0
        %1750 = vmatpush.msra.mxu0 0.0
        %1751 = vmatpush.msra.mxu0 0.0
        %1752 = vmatpush.msra.mxu0 0.0
        %1753 = vmatpush.msra.mxu0 0.0
        %1754 = vmatpush.msra.mxu0 0.0
        %1755 = vmatpush.msra.mxu0 0.0
        %1756 = vmatpush.msra.mxu0 0.0
        %1757 = vmatpush.msra.mxu0 0.0
        %1758 = vmatpush.msra.mxu0 %v479
        %1759 = vmatmul.f32.gmra.mxu0 %v1741
        %v1760 = vpop.f32.mrf.mxu0
        %v1761 = vadd.f32 0.0, %v1760
        %1762 = vdwg.mxu0
        %v1763 = vsel %vm746, %v1435, 0
        %1765 = vmatpush.msra.mxu0 0.0
        %1766 = vmatpush.msra.mxu0 0.0
        %1767 = vmatpush.msra.mxu0 0.0
        %1768 = vmatpush.msra.mxu0 0.0
        %1769 = vmatpush.msra.mxu0 0.0
        %1770 = vmatpush.msra.mxu0 0.0
        %1771 = vmatpush.msra.mxu0 0.0
        %1772 = vmatpush.msra.mxu0 0.0
        %1773 = vmatpush.msra.mxu0 0.0
        %1774 = vmatpush.msra.mxu0 0.0
        %1775 = vmatpush.msra.mxu0 0.0
        %1776 = vmatpush.msra.mxu0 0.0
        %1777 = vmatpush.msra.mxu0 0.0
        %1778 = vmatpush.msra.mxu0 0.0
        %1779 = vmatpush.msra.mxu0 0.0
        %1780 = vmatpush.msra.mxu0 %v480
        %1781 = vmatmul.f32.gmra.mxu0 %v1763
        %v1782 = vpop.f32.mrf.mxu0
        %v1783 = vadd.f32 0.0, %v1782
        %1784 = vdwg.mxu0
        %v1785 = vsel %vm746, %v1436, 0
        %1787 = vmatpush.msra.mxu0 0.0
        %1788 = vmatpush.msra.mxu0 0.0
        %1789 = vmatpush.msra.mxu0 0.0
        %1790 = vmatpush.msra.mxu0 0.0
        %1791 = vmatpush.msra.mxu0 0.0
        %1792 = vmatpush.msra.mxu0 0.0
        %1793 = vmatpush.msra.mxu0 0.0
        %1794 = vmatpush.msra.mxu0 0.0
        %1795 = vmatpush.msra.mxu0 0.0
        %1796 = vmatpush.msra.mxu0 0.0
        %1797 = vmatpush.msra.mxu0 0.0
        %1798 = vmatpush.msra.mxu0 0.0
        %1799 = vmatpush.msra.mxu0 0.0
        %1800 = vmatpush.msra.mxu0 0.0
        %1801 = vmatpush.msra.mxu0 0.0
        %1802 = vmatpush.msra.mxu0 %v481
        %1803 = vmatmul.f32.gmra.mxu0 %v1785
        %v1804 = vpop.f32.mrf.mxu0
        %v1805 = vadd.f32 0.0, %v1804
        %1806 = vdwg.mxu0
        %v1807 = vld [vmem:[%s6] sm:$0xf]
        %v1808 = vld [vmem:[%s6 + $0x4] sm:$0xf]
        %v1809 = vld [vmem:[%s6 + $0x8] sm:$0xf]
        %v1810 = vld [vmem:[%s6 + $0xc] sm:$0xf]
        %v1811 = vunpack.c.l.bf16 %v1807
        %v1812 = vunpack.c.l.bf16 %v1808
        %v1813 = vunpack.c.l.bf16 %v1809
        %v1814 = vunpack.c.l.bf16 %v1810
        %v1815 = vld [vmem:[%s7] sm:$0x1]
        %v1817 = vperm.slane %v1815, 0
        %v1835 = vrot.slane %v1497, 7
        %v1836 = vsel %vm723, %v1835, %v1475
        %v1837 = vrot.slane %v1519, 6
        %v1838 = vsel %vm725, %v1837, %v1836
        %v1839 = vrot.slane %v1541, 5
        %v1840 = vsel %vm727, %v1839, %v1838
        %v1841 = vrot.slane %v1563, 4
        %v1842 = vsel %vm729, %v1841, %v1840
        %v1843 = vrot.slane %v1585, 3
        %v1844 = vsel %vm731, %v1843, %v1842
        %v1845 = vrot.slane %v1607, 2
        %v1846 = vsel %vm733, %v1845, %v1844
        %v1847 = vrot.slane %v1629, 1
        %v1848 = vsel %vm735, %v1847, %v1846
        %v1849 = vrot.slane %v1673, 7
        %v1850 = vsel %vm723, %v1849, %v1651
        %v1851 = vrot.slane %v1695, 6
        %v1852 = vsel %vm725, %v1851, %v1850
        %v1853 = vrot.slane %v1717, 5
        %v1854 = vsel %vm727, %v1853, %v1852
        %v1855 = vrot.slane %v1739, 4
        %v1856 = vsel %vm729, %v1855, %v1854
        %v1857 = vrot.slane %v1761, 3
        %v1858 = vsel %vm731, %v1857, %v1856
        %v1859 = vrot.slane %v1783, 2
        %v1860 = vsel %vm733, %v1859, %v1858
        %v1861 = vrot.slane %v1805, 1
        %v1862 = vsel %vm735, %v1861, %v1860
        %v1863 = vsel %vm512, %v1848, 0
        %v1865 = vsel %vm512, %v1862, 0
        %1867 = vmatpush.msra.mxu0 0.0
        %1868 = vmatpush.msra.mxu0 0.0
        %1869 = vmatpush.msra.mxu0 0.0
        %1870 = vmatpush.msra.mxu0 0.0
        %1871 = vmatpush.msra.mxu0 0.0
        %1872 = vmatpush.msra.mxu0 0.0
        %1873 = vmatpush.msra.mxu0 0.0
        %1874 = vmatpush.msra.mxu0 0.0
        %1875 = vmatpush.msra.mxu0 0.0
        %1876 = vmatpush.msra.mxu0 0.0
        %1877 = vmatpush.msra.mxu0 0.0
        %1878 = vmatpush.msra.mxu0 0.0
        %1879 = vmatpush.msra.mxu0 %v1814
        %1880 = vmatpush.msra.mxu0 %v1813
        %1881 = vmatpush.msra.mxu0 %v1812
        %1882 = vmatpush.msra.mxu0 %v1811
        %1883 = vmatmul.f32.gmra.mxu0 %v1863
        %v1884 = vpop.f32.mrf.mxu0
        %v1885 = vadd.f32 %v1817, %v1884
        %1886 = vmatmul.f32.gmra.mxu0 %v1865
        %v1887 = vpop.f32.mrf.mxu0
        %v1888 = vadd.f32 %v1817, %v1887
        %1889 = vdwg.mxu0
        %v1890 = vmax.f32 %v1885, 0.0
        %v1891 = vmax.f32 %v1888, 0.0
        %v1892 = vld [vmem:[%s8] sm:$0xff]
        %v1893 = vld [vmem:[%s8 + $0x8] sm:$0xff]
        %s1894 = sld [smem:[#allocation3]]
        %v1895 = vstv %s1894
        %v1897 = vsel %vm622, %v1890, 0
        %v1900 = vsel %vm622, %v1891, 0
        %1902 = vmatpush.msra.mxu0 0.0
        %1903 = vmatpush.msra.mxu0 0.0
        %1904 = vmatpush.msra.mxu0 0.0
        %1905 = vmatpush.msra.mxu0 0.0
        %1906 = vmatpush.msra.mxu0 0.0
        %1907 = vmatpush.msra.mxu0 0.0
        %1908 = vmatpush.msra.mxu0 0.0
        %1909 = vmatpush.msra.mxu0 0.0
        %1910 = vmatpush.msra.mxu0 0.0
        %1911 = vmatpush.msra.mxu0 0.0
        %1912 = vmatpush.msra.mxu0 0.0
        %1913 = vmatpush.msra.mxu0 0.0
        %1914 = vmatpush.msra.mxu0 0.0
        %1915 = vmatpush.msra.mxu0 0.0
        %1916 = vmatpush.msra.mxu0 %v1893
        %1917 = vmatpush.msra.mxu0 %v1892
        %1918 = vmatmul.f32.gmra.mxu0 %v1897
        %v1919 = vpop.f32.mrf.mxu0
        %v1920 = vadd.f32 %v1895, %v1919
        %1921 = vmatmul.f32.gmra.mxu0 %v1900
        %v1922 = vpop.f32.mrf.mxu0
        %v1923 = vadd.f32 %v1895, %v1922
        %1924 = vdwg.mxu0
        %vm1925 = vcmask 7168
        %1926 = vst.msk [vmem:[%s441] sm:$0xff] %vm1925, %v1920
        %1927 = vst.msk [vmem:[%s441 + $0x8] sm:$0xff] %vm1925, %v1923
        %s1928 = smul.u32 2, %s28
        %p1929 = scmp.lt.s32.totalorder %s1928, 3
        %s1930 = scalar_select %p1929, %s1928, 3
        %s1931 = smul.addr %s1930, 8
        %s1932 = scalar_lea.vmem %s10, %s1931
        %s1933 = smul.u32 2, %s28
        %p1934 = scmp.lt.s32.totalorder %s1933, 3
        %s1935 = scalar_select %p1934, %s1933, 3
        %s1936 = smul.addr %s1935, 8
        %s1937 = scalar_lea.vmem %s11, %s1936
        // Predicated region
        $region65: #{tpu_custom_call.1} parent=59 // pred_check
          %p1938 = pneg %p266
        $region66: #{tpu_custom_call.1} parent=59 // pred_check_branch
          %1940 = sbr.rel (%p1938) target = $region68
        $region67: #{tpu_custom_call.1} parent=59 // pred_region
          %s1941 = smul.u32 2, %s28
        $region68: #{tpu_custom_call.1} parent=59 // pred_fallthru
          _
        // Predicated region
        $region69: #{tpu_custom_call.1} parent=59 // pred_check
          %p1942 = pneg %p292
        $region70: #{tpu_custom_call.1} parent=59 // pred_check_branch
          %1944 = sbr.rel (%p1942) target = $region72
        $region71: #{tpu_custom_call.1} parent=59 // pred_region
          %s1945 = smul.u32 2, %s28
        $region72: #{tpu_custom_call.1} parent=59 // pred_fallthru
          _
      $region60: #{tpu_custom_call.1} parent=5 // pred_fallthru
        _
      %p1946 = scmp.le.s32.totalorder 2, %s23
      // Predicated region
      $region73: #{tpu_custom_call.1} parent=5 // pred_check
        %p1947 = pneg %p1946
      $region74: #{tpu_custom_call.1} parent=5 // pred_check_branch
        %1949 = sbr.rel (%p1947) target = $region76
      $region75: #{tpu_custom_call.1} parent=5 // pred_region
        %s1950 = ssub.s32 %s23, 2
        // Predicated region
        $region77: #{tpu_custom_call.1} parent=75 // pred_check
          %p1951 = pneg %p272
        $region78: #{tpu_custom_call.1} parent=75 // pred_check_branch
          %1953 = sbr.rel (%p1951) target = $region80
        $region79: #{tpu_custom_call.1} parent=75 // pred_region
          %s1954 = smul.u32 2, %s29
          %p1955 = scmp.lt.s32.totalorder %s1954, 3
          %s1956 = scalar_select %p1955, %s1954, 3
          %s1957 = smul.addr %s1956, 8
          %s1958 = scalar_lea.vmem %s10, %s1957
        $region80: #{tpu_custom_call.1} parent=75 // pred_fallthru
          _
        // Predicated region
        $region81: #{tpu_custom_call.1} parent=75 // pred_check
          %p1959 = pneg %p298
        $region82: #{tpu_custom_call.1} parent=75 // pred_check_branch
          %1961 = sbr.rel (%p1959) target = $region84
        $region83: #{tpu_custom_call.1} parent=75 // pred_region
          %s1962 = smul.u32 2, %s29
          %p1963 = scmp.lt.s32.totalorder %s1962, 3
          %s1964 = scalar_select %p1963, %s1962, 3
          %s1965 = smul.addr %s1964, 8
          %s1966 = scalar_lea.vmem %s11, %s1965
        $region84: #{tpu_custom_call.1} parent=75 // pred_fallthru
          _
      $region76: #{tpu_custom_call.1} parent=5 // pred_fallthru
        _
    $region6: #{tpu_custom_call.1} parent=1 // loop_footer
      %s27 = sadd.s32 1, %s23
    $region7: #{tpu_custom_call.1} parent=1 // loop_footer_branch
      %22 = sbr.rel target = $region3
    $region8: #{tpu_custom_call.1} parent=1 // loop_exit
      _
    %1967 = vsyncpa [#allocation5], 1
    %s1968 = scalar_lea.sflag [#allocation5], 1
    %1969 = vsyncpa %s1968, 1

</llo_original>
